<compile_context>
chip_gen: v6e
topology: v6e:2x2x1
jax: 0.10.0
libtpu: 0.0.40
codegen_flags: <defaults>
</compile_context>

<pallas_src>
import math

import jax
import jax.numpy as jnp
import numpy as np
from jax.experimental import pallas as pl
from jax.experimental.pallas import tpu as pltpu

_INV_SQRT2 = 1.0 / math.sqrt(2.0)


# ---------------------------------------------------------------------------
# Fused kernel: SpatialGate -> residual + LayerNorm -> token-mixing MLP -> residual
# ---------------------------------------------------------------------------
def _token_mixer_kernel(x_tok_ref, x_chw_ref, cm_ref, bn_shift_ref,
                        ln_g_ref, ln_b_ref, w1_ref, b1_ref, w2_ref, b2_ref,
                        out_ref, xt_ref):
    # x_tok_ref: (Bt, P, C) token layout;  x_chw_ref: (Bt, C, HW) raw-reshape CHW view.
    # cm_ref: (2*HW, HW) fused conv-as-matrix [max rows ; mean rows] with BN scale folded.
    # bn_shift_ref: (1,) SMEM folded BatchNorm shift.
    # ln_g/ln_b: (C, 1);  w1: (P, Hd);  b1: (1, Hd);  w2: (Hd, P);  b2: (1, P).
    # out_ref: (Bt, C, P) (lane-dense; transposed back to token layout in XLA).
    # xt_ref:  (Bt, C, P) VMEM scratch holding the transposed input.
    Bt, P, C = x_tok_ref.shape

    x_chw = x_chw_ref[...]                                 # (Bt, C, HW)

    # Token layout -> (Bt, C, P), once.  Bt unrolled 2-D transposes (XLU slot is idle).
    for b in range(Bt):
        xt_ref[b] = x_tok_ref[b].T
    xT = xt_ref[...]                                       # (Bt, C, P)

    # --- SpatialGate: ChannelPool(max, mean) -> fused 7x7 conv-as-matmul -> BN -> sigmoid
    mx = jnp.max(x_chw, axis=1)                            # (Bt, HW)
    mn = jnp.mean(x_chw, axis=1)                           # (Bt, HW)
    pooled = jnp.concatenate([mx, mn], axis=-1)            # (Bt, 2*HW): one K=128 matmul
    conv = (jnp.dot(pooled, cm_ref[...], preferred_element_type=jnp.float32)
            + bn_shift_ref[0])                             # (Bt, HW)
    scale = jax.nn.sigmoid(conv)                           # EUP slot
    xg_chw = x_chw * scale[:, None, :]                     # (Bt, C, HW), gate the input

    # --- residual add + LayerNorm over the feature axis, computed in (Bt, C, P) layout.
    # Token-layout gated map is xg_chw transposed per batch, so t (C-major) = xT + xg_chw.
    t = xT + xg_chw                                        # (Bt, C, P)
    mu = jnp.mean(t, axis=1, keepdims=True)                # (Bt, 1, P)
    d = t - mu
    var = jnp.mean(d * d, axis=1, keepdims=True)
    xn = d * jax.lax.rsqrt(var + 1e-5) * ln_g_ref[...] + ln_b_ref[...]   # (Bt, C, P)

    # --- token-mixing MLP over the patch axis; merge (Bt, C) rows to fill the MXU.
    xn2 = xn.reshape(Bt * C, P)                            # free merge (C % 8 == 0)
    h = jnp.dot(xn2, w1_ref[...], preferred_element_type=jnp.float32) + b1_ref[...]
    h = 0.5 * h * (1.0 + jax.lax.erf(h * _INV_SQRT2))      # exact GELU (matches F.gelu)
    # TODO(synk): Dropout layers are identity here (eval-mode semantics).
    y = jnp.dot(h, w2_ref[...], preferred_element_type=jnp.float32) + b2_ref[...]

    # --- final residual, stored lane-dense in (Bt, C, P) layout.
    out_ref[...] = y.reshape(Bt, C, P) + xT


# ---------------------------------------------------------------------------
# Wrapper
# ---------------------------------------------------------------------------
def _choose_bt(B, C, target_rows=256):
    """Largest divisor of B with Bt*C <= target_rows, preferring >=2 grid steps (v7x)."""
    target = max(1, target_rows // C)
    divisors = [d for d in range(1, B + 1) if B % d == 0 and d <= target]
    two_step = [d for d in divisors if B // d >= 2]
    return max(two_step) if two_step else max(divisors)


@jax.jit
def token_mixer_forward(x, params):
    B, P, C = x.shape
    HW = P
    Hd = params["w1"].shape[1]
    Bt = _choose_bt(B, C)

    # Raw reshape to the NCHW-flattened view (metadata-only; matches PyTorch .reshape).
    x_chw = x.reshape(B, C, HW)

    out_cp = pl.pallas_call(
        _token_mixer_kernel,
        out_shape=jax.ShapeDtypeStruct((B, C, P), jnp.float32),
        grid_spec=pltpu.PrefetchScalarGridSpec(
            num_scalar_prefetch=0,
            grid=(B // Bt,),
            in_specs=[
                pl.BlockSpec((Bt, P, C), lambda i: (i, 0, 0)),       # x, token layout
                pl.BlockSpec((Bt, C, HW), lambda i: (i, 0, 0)),      # x, raw CHW view
                pl.BlockSpec((2 * HW, HW), lambda i: (0, 0)),        # fused conv-as-matrix
                pl.BlockSpec(memory_space=pltpu.MemorySpace.SMEM),   # folded BN shift
                pl.BlockSpec((C, 1), lambda i: (0, 0)),              # LayerNorm gamma
                pl.BlockSpec((C, 1), lambda i: (0, 0)),              # LayerNorm beta
                pl.BlockSpec((P, Hd), lambda i: (0, 0)),             # w1
                pl.BlockSpec((1, Hd), lambda i: (0, 0)),             # b1
                pl.BlockSpec((Hd, P), lambda i: (0, 0)),             # w2
                pl.BlockSpec((1, P), lambda i: (0, 0)),              # b2
            ],
            out_specs=pl.BlockSpec((Bt, C, P), lambda i: (i, 0, 0)),
            scratch_shapes=[pltpu.VMEM((Bt, C, P), jnp.float32)],
        ),
        compiler_params=pltpu.CompilerParams(dimension_semantics=("parallel",)),
    )(x, x_chw, params["cm"], params["bn_shift"],
      params["ln_g_col"], params["ln_b_col"],
      params["w1"], params["b1"], params["w2"], params["b2"])

    # Single XLA transpose back to the (B, P, C) token layout.
    return jnp.transpose(out_cp, (0, 2, 1))


# ---------------------------------------------------------------------------
# Host-side precompute: 7x7 conv (padding=3, bias=False) on an HxW map expressed as one
# dense (2*HW, HW) matrix (max-pool rows stacked over mean-pool rows), BN scale folded in.
# out_flat = concat([mx_flat, mn_flat], -1) @ M
# ---------------------------------------------------------------------------
def _conv_as_matrix(conv_w, H, W, bn_scale):
    HW = H * W
    w = np.asarray(conv_w)[0]                 # (2, 7, 7), OIHW with O=1
    M = np.zeros((2 * HW, HW), np.float32)
    for c in range(2):
        for ho in range(H):
            for wo in range(W):
                for kh in range(7):
                    for kw in range(7):
                        hi = ho + kh - 3
                        wi = wo + kw - 3
                        if 0 <= hi < H and 0 <= wi < W:
                            M[c * HW + hi * W + wi, ho * W + wo] += w[c, kh, kw]
    return jnp.asarray(M * bn_scale, dtype=jnp.float32)


# ---------------------------------------------------------------------------
# Deterministic parameter init (shapes from the module's __init__)
# ---------------------------------------------------------------------------
def init_params(key, num_features, num_patches, expansion_factor, H, W):
    hidden = num_patches * expansion_factor
    k1, k2, k3, k4, k5 = jax.random.split(key, 5)

    # SpatialGate conv: Conv2d(2, 1, 7, padding=3, bias=False) -> weight (1, 2, 7, 7)
    cb = 1.0 / math.sqrt(2 * 7 * 7)
    conv_w = jax.random.uniform(k1, (1, 2, 7, 7), jnp.float32, -cb, cb)
    # BatchNorm2d(1), eval mode defaults: gamma=1, beta=0, running_mean=0, running_var=1
    bn_scale = 1.0 / math.sqrt(1.0 + 1e-5)
    bn_shift = 0.0
    cm = _conv_as_matrix(conv_w, H, W, bn_scale)

    ln_g = jnp.ones((num_features,), jnp.float32)
    ln_b = jnp.zeros((num_features,), jnp.float32)

    b1b = 1.0 / math.sqrt(num_patches)
    w1 = jax.random.uniform(k2, (num_patches, hidden), jnp.float32, -b1b, b1b)
    b1 = jax.random.uniform(k3, (1, hidden), jnp.float32, -b1b, b1b)
    b2b = 1.0 / math.sqrt(hidden)
    w2 = jax.random.uniform(k4, (hidden, num_patches), jnp.float32, -b2b, b2b)
    b2 = jax.random.uniform(k5, (1, num_patches), jnp.float32, -b2b, b2b)

    return {
        # kernel-ready parameters
        "cm": cm,
        "bn_shift": jnp.array([bn_shift], jnp.float32),
        "ln_g_col": ln_g.reshape(num_features, 1),
        "ln_b_col": ln_b.reshape(num_features, 1),
        "w1": w1, "b1": b1, "w2": w2, "b2": b2,
        # reference-only parameters
        "conv_w": conv_w,
        "bn": jnp.array([bn_scale, bn_shift], jnp.float32),
        "ln_g": ln_g.reshape(1, num_features),
        "ln_b": ln_b.reshape(1, num_features),
    }


# ---------------------------------------------------------------------------
# Pure-JAX reference (same semantics as the PyTorch module, eval mode)
# ---------------------------------------------------------------------------
def reference_forward(x, params):
    B, P, C = x.shape
    H = W = int(math.sqrt(P))
    residual = x
    xr = x.reshape(B, C, H, W)
    pooled = jnp.stack([jnp.max(xr, axis=1), jnp.mean(xr, axis=1)], axis=1)  # (B,2,H,W)
    conv = jax.lax.conv_general_dilated(
        pooled, params["conv_w"], (1, 1), ((3, 3), (3, 3)),
        dimension_numbers=("NCHW", "OIHW", "NCHW"))
    y = conv * params["bn"][0] + params["bn"][1]
    xg = xr * jax.nn.sigmoid(y)
    xg = jnp.transpose(xg, (0, 2, 3, 1)).reshape(B, P, C)
    t = residual + xg
    mu = jnp.mean(t, -1, keepdims=True)
    var = jnp.mean((t - mu) ** 2, -1, keepdims=True)
    xn = (t - mu) * jax.lax.rsqrt(var + 1e-5) * params["ln_g"] + params["ln_b"]
    xt = jnp.transpose(xn, (0, 2, 1))
    h = xt @ params["w1"] + params["b1"]
    h = 0.5 * h * (1.0 + jax.lax.erf(h / math.sqrt(2.0)))
    y2 = h @ params["w2"] + params["b2"]
    return jnp.transpose(y2, (0, 2, 1)) + residual


if __name__ == "__main__":
    B = 16          # batch (Bt=8 chosen -> Bt*C = 128 MXU rows, 2 grid steps)
    C = 16          # num_features
    H = W = 8       # patch grid side (image_size)
    P = H * W       # num_patches = 64
    EF = 2          # expansion_factor -> MLP hidden = 128

    key = jax.random.PRNGKey(0)
    kx, kp = jax.random.split(key)
    x = jax.random.normal(kx, (B, P, C), jnp.float32)
    params = init_params(kp, C, P, EF, H, W)

    out = jax.block_until_ready(token_mixer_forward(x, params))

    ref = jax.block_until_ready(reference_forward(x, params))
    assert out.shape == (B, P, C)
    assert jnp.allclose(out, ref, atol=1e-4, rtol=1e-4), "mismatch vs reference"

    print("KERNEL_OK")
</pallas_src>

<mosaic_0001>
module attributes {stable_mosaic.version = 11 : i64} {
  func.func @_token_mixer_kernel(%arg0: i32, %arg1: memref<8x64x16xf32, #tpu.memory_space<vmem>>, %arg2: memref<8x16x64xf32, #tpu.memory_space<vmem>>, %arg3: memref<128x64xf32, #tpu.memory_space<vmem>>, %arg4: memref<1xf32, #tpu.memory_space<smem>>, %arg5: memref<16x1xf32, #tpu.memory_space<vmem>>, %arg6: memref<16x1xf32, #tpu.memory_space<vmem>>, %arg7: memref<64x128xf32, #tpu.memory_space<vmem>>, %arg8: memref<1x128xf32, #tpu.memory_space<vmem>>, %arg9: memref<128x64xf32, #tpu.memory_space<vmem>>, %arg10: memref<1x64xf32, #tpu.memory_space<vmem>>, %arg11: memref<8x16x64xf32, #tpu.memory_space<vmem>>, %arg12: memref<8x16x64xf32, #tpu.memory_space<vmem>>) attributes {dimension_semantics = [#tpu.dimension_semantics<parallel>], iteration_bounds = array<i64: 2>, scalar_prefetch = 0 : i64, scratch_operands = 1 : i64, tpu.core_type = #tpu.core_type<tc>, window_params = [{transform_indices = @transform_0, window_bounds = array<i64: 8, 64, 16>}, {transform_indices = @transform_1, window_bounds = array<i64: 8, 16, 64>}, {pipeline_mode = #tpu.pipeline_mode<synchronous>, transform_indices = @transform_2, window_bounds = array<i64: 128, 64>}, {transform_indices = @transform_3, window_bounds = array<i64: 1>}, {pipeline_mode = #tpu.pipeline_mode<synchronous>, transform_indices = @transform_4, window_bounds = array<i64: 16, 1>}, {pipeline_mode = #tpu.pipeline_mode<synchronous>, transform_indices = @transform_5, window_bounds = array<i64: 16, 1>}, {pipeline_mode = #tpu.pipeline_mode<synchronous>, transform_indices = @transform_6, window_bounds = array<i64: 64, 128>}, {pipeline_mode = #tpu.pipeline_mode<synchronous>, transform_indices = @transform_7, window_bounds = array<i64: 1, 128>}, {pipeline_mode = #tpu.pipeline_mode<synchronous>, transform_indices = @transform_8, window_bounds = array<i64: 128, 64>}, {pipeline_mode = #tpu.pipeline_mode<synchronous>, transform_indices = @transform_9, window_bounds = array<i64: 1, 64>}, {transform_indices = @transform_10, window_bounds = array<i64: 8, 16, 64>}]} {
    %c0 = arith.constant 0 : index
    %c0_0 = arith.constant 0 : index
    %c0_1 = arith.constant 0 : index
    %0 = vector.load %arg2[%c0, %c0_0, %c0_1] : memref<8x16x64xf32, #tpu.memory_space<vmem>>, vector<8x16x64xf32>
    %c0_2 = arith.constant 0 : index
    %c0_3 = arith.constant 0 : index
    %c0_4 = arith.constant 0 : index
    %1 = vector.load %arg1[%c0_2, %c0_3, %c0_4] : memref<8x64x16xf32, #tpu.memory_space<vmem>>, vector<1x64x16xf32>
    %2 = vector.shape_cast %1 : vector<1x64x16xf32> to vector<64x16xf32>
    %3 = tpu.transpose %2, [1, 0] : vector<64x16xf32> -> vector<16x64xf32>
    %c0_5 = arith.constant 0 : index
    %c0_6 = arith.constant 0 : index
    %c0_7 = arith.constant 0 : index
    %4 = vector.load %arg12[%c0_5, %c0_6, %c0_7] : memref<8x16x64xf32, #tpu.memory_space<vmem>>, vector<1x16x64xf32>
    %5 = vector.shape_cast %4 : vector<1x16x64xf32> to vector<16x64xf32>
    %6 = vector.shape_cast %3 : vector<16x64xf32> to vector<1x16x64xf32>
    tpu.vector_store %arg12[%c0_5, %c0_6, %c0_7], %6 {strides = array<i32>} : memref<8x16x64xf32, #tpu.memory_space<vmem>>, vector<1x16x64xf32>,
    %c1 = arith.constant 1 : index
    %c0_8 = arith.constant 0 : index
    %c0_9 = arith.constant 0 : index
    %7 = vector.load %arg1[%c1, %c0_8, %c0_9] : memref<8x64x16xf32, #tpu.memory_space<vmem>>, vector<1x64x16xf32>
    %8 = vector.shape_cast %7 : vector<1x64x16xf32> to vector<64x16xf32>
    %9 = tpu.transpose %8, [1, 0] : vector<64x16xf32> -> vector<16x64xf32>
    %c1_10 = arith.constant 1 : index
    %c0_11 = arith.constant 0 : index
    %c0_12 = arith.constant 0 : index
    %10 = vector.load %arg12[%c1_10, %c0_11, %c0_12] : memref<8x16x64xf32, #tpu.memory_space<vmem>>, vector<1x16x64xf32>
    %11 = vector.shape_cast %10 : vector<1x16x64xf32> to vector<16x64xf32>
    %12 = vector.shape_cast %9 : vector<16x64xf32> to vector<1x16x64xf32>
    tpu.vector_store %arg12[%c1_10, %c0_11, %c0_12], %12 {strides = array<i32>} : memref<8x16x64xf32, #tpu.memory_space<vmem>>, vector<1x16x64xf32>,
    %c2 = arith.constant 2 : index
    %c0_13 = arith.constant 0 : index
    %c0_14 = arith.constant 0 : index
    %13 = vector.load %arg1[%c2, %c0_13, %c0_14] : memref<8x64x16xf32, #tpu.memory_space<vmem>>, vector<1x64x16xf32>
    %14 = vector.shape_cast %13 : vector<1x64x16xf32> to vector<64x16xf32>
    %15 = tpu.transpose %14, [1, 0] : vector<64x16xf32> -> vector<16x64xf32>
    %c2_15 = arith.constant 2 : index
    %c0_16 = arith.constant 0 : index
    %c0_17 = arith.constant 0 : index
    %16 = vector.load %arg12[%c2_15, %c0_16, %c0_17] : memref<8x16x64xf32, #tpu.memory_space<vmem>>, vector<1x16x64xf32>
    %17 = vector.shape_cast %16 : vector<1x16x64xf32> to vector<16x64xf32>
    %18 = vector.shape_cast %15 : vector<16x64xf32> to vector<1x16x64xf32>
    tpu.vector_store %arg12[%c2_15, %c0_16, %c0_17], %18 {strides = array<i32>} : memref<8x16x64xf32, #tpu.memory_space<vmem>>, vector<1x16x64xf32>,
    %c3 = arith.constant 3 : index
    %c0_18 = arith.constant 0 : index
    %c0_19 = arith.constant 0 : index
    %19 = vector.load %arg1[%c3, %c0_18, %c0_19] : memref<8x64x16xf32, #tpu.memory_space<vmem>>, vector<1x64x16xf32>
    %20 = vector.shape_cast %19 : vector<1x64x16xf32> to vector<64x16xf32>
    %21 = tpu.transpose %20, [1, 0] : vector<64x16xf32> -> vector<16x64xf32>
    %c3_20 = arith.constant 3 : index
    %c0_21 = arith.constant 0 : index
    %c0_22 = arith.constant 0 : index
    %22 = vector.load %arg12[%c3_20, %c0_21, %c0_22] : memref<8x16x64xf32, #tpu.memory_space<vmem>>, vector<1x16x64xf32>
    %23 = vector.shape_cast %22 : vector<1x16x64xf32> to vector<16x64xf32>
    %24 = vector.shape_cast %21 : vector<16x64xf32> to vector<1x16x64xf32>
    tpu.vector_store %arg12[%c3_20, %c0_21, %c0_22], %24 {strides = array<i32>} : memref<8x16x64xf32, #tpu.memory_space<vmem>>, vector<1x16x64xf32>,
    %c4 = arith.constant 4 : index
    %c0_23 = arith.constant 0 : index
    %c0_24 = arith.constant 0 : index
    %25 = vector.load %arg1[%c4, %c0_23, %c0_24] : memref<8x64x16xf32, #tpu.memory_space<vmem>>, vector<1x64x16xf32>
    %26 = vector.shape_cast %25 : vector<1x64x16xf32> to vector<64x16xf32>
    %27 = tpu.transpose %26, [1, 0] : vector<64x16xf32> -> vector<16x64xf32>
    %c4_25 = arith.constant 4 : index
    %c0_26 = arith.constant 0 : index
    %c0_27 = arith.constant 0 : index
    %28 = vector.load %arg12[%c4_25, %c0_26, %c0_27] : memref<8x16x64xf32, #tpu.memory_space<vmem>>, vector<1x16x64xf32>
    %29 = vector.shape_cast %28 : vector<1x16x64xf32> to vector<16x64xf32>
    %30 = vector.shape_cast %27 : vector<16x64xf32> to vector<1x16x64xf32>
    tpu.vector_store %arg12[%c4_25, %c0_26, %c0_27], %30 {strides = array<i32>} : memref<8x16x64xf32, #tpu.memory_space<vmem>>, vector<1x16x64xf32>,
    %c5 = arith.constant 5 : index
    %c0_28 = arith.constant 0 : index
    %c0_29 = arith.constant 0 : index
    %31 = vector.load %arg1[%c5, %c0_28, %c0_29] : memref<8x64x16xf32, #tpu.memory_space<vmem>>, vector<1x64x16xf32>
    %32 = vector.shape_cast %31 : vector<1x64x16xf32> to vector<64x16xf32>
    %33 = tpu.transpose %32, [1, 0] : vector<64x16xf32> -> vector<16x64xf32>
    %c5_30 = arith.constant 5 : index
    %c0_31 = arith.constant 0 : index
    %c0_32 = arith.constant 0 : index
    %34 = vector.load %arg12[%c5_30, %c0_31, %c0_32] : memref<8x16x64xf32, #tpu.memory_space<vmem>>, vector<1x16x64xf32>
    %35 = vector.shape_cast %34 : vector<1x16x64xf32> to vector<16x64xf32>
    %36 = vector.shape_cast %33 : vector<16x64xf32> to vector<1x16x64xf32>
    tpu.vector_store %arg12[%c5_30, %c0_31, %c0_32], %36 {strides = array<i32>} : memref<8x16x64xf32, #tpu.memory_space<vmem>>, vector<1x16x64xf32>,
    %c6 = arith.constant 6 : index
    %c0_33 = arith.constant 0 : index
    %c0_34 = arith.constant 0 : index
    %37 = vector.load %arg1[%c6, %c0_33, %c0_34] : memref<8x64x16xf32, #tpu.memory_space<vmem>>, vector<1x64x16xf32>
    %38 = vector.shape_cast %37 : vector<1x64x16xf32> to vector<64x16xf32>
    %39 = tpu.transpose %38, [1, 0] : vector<64x16xf32> -> vector<16x64xf32>
    %c6_35 = arith.constant 6 : index
    %c0_36 = arith.constant 0 : index
    %c0_37 = arith.constant 0 : index
    %40 = vector.load %arg12[%c6_35, %c0_36, %c0_37] : memref<8x16x64xf32, #tpu.memory_space<vmem>>, vector<1x16x64xf32>
    %41 = vector.shape_cast %40 : vector<1x16x64xf32> to vector<16x64xf32>
    %42 = vector.shape_cast %39 : vector<16x64xf32> to vector<1x16x64xf32>
    tpu.vector_store %arg12[%c6_35, %c0_36, %c0_37], %42 {strides = array<i32>} : memref<8x16x64xf32, #tpu.memory_space<vmem>>, vector<1x16x64xf32>,
    %c7 = arith.constant 7 : index
    %c0_38 = arith.constant 0 : index
    %c0_39 = arith.constant 0 : index
    %43 = vector.load %arg1[%c7, %c0_38, %c0_39] : memref<8x64x16xf32, #tpu.memory_space<vmem>>, vector<1x64x16xf32>
    %44 = vector.shape_cast %43 : vector<1x64x16xf32> to vector<64x16xf32>
    %45 = tpu.transpose %44, [1, 0] : vector<64x16xf32> -> vector<16x64xf32>
    %c7_40 = arith.constant 7 : index
    %c0_41 = arith.constant 0 : index
    %c0_42 = arith.constant 0 : index
    %46 = vector.load %arg12[%c7_40, %c0_41, %c0_42] : memref<8x16x64xf32, #tpu.memory_space<vmem>>, vector<1x16x64xf32>
    %47 = vector.shape_cast %46 : vector<1x16x64xf32> to vector<16x64xf32>
    %48 = vector.shape_cast %45 : vector<16x64xf32> to vector<1x16x64xf32>
    tpu.vector_store %arg12[%c7_40, %c0_41, %c0_42], %48 {strides = array<i32>} : memref<8x16x64xf32, #tpu.memory_space<vmem>>, vector<1x16x64xf32>,
    %c0_43 = arith.constant 0 : index
    %c0_44 = arith.constant 0 : index
    %c0_45 = arith.constant 0 : index
    %49 = vector.load %arg12[%c0_43, %c0_44, %c0_45] : memref<8x16x64xf32, #tpu.memory_space<vmem>>, vector<8x16x64xf32>
    %cst = arith.constant dense<0xFF800000> : vector<8x64xf32>
    %50 = vector.multi_reduction <maximumf>, %0, %cst [1] : vector<8x16x64xf32> to vector<8x64xf32>
    %cst_46 = arith.constant dense<0.000000e+00> : vector<8x64xf32>
    %51 = vector.multi_reduction <add>, %0, %cst_46 [1] : vector<8x16x64xf32> to vector<8x64xf32>
    %cst_47 = arith.constant 1.600000e+01 : f32
    %52 = vector.broadcast %cst_47 : f32 to vector<8x64xf32>
    %53 = arith.divf %51, %52 : vector<8x64xf32>
    %54 = tpu.concatenate %50, %53 in 1 : vector<8x64xf32>, vector<8x64xf32> -> vector<8x128xf32>
    %c0_48 = arith.constant 0 : index
    %c0_49 = arith.constant 0 : index
    %55 = vector.load %arg3[%c0_48, %c0_49] : memref<128x64xf32, #tpu.memory_space<vmem>>, vector<128x64xf32>
    %cst_50 = arith.constant dense<0.000000e+00> : vector<8x64xf32>
    %56 = tpu.matmul %54, %55, %cst_50 {dimension_numbers = #tpu.dot_dimension_numbers<[1], [0], [0], [1], [0, 0, 1, 1], [], []>} : vector<8x128xf32>, vector<128x64xf32>, vector<8x64xf32> -> vector<8x64xf32>
    %c0_51 = arith.constant 0 : index
    %57 = memref.load %arg4[%c0_51] : memref<1xf32, #tpu.memory_space<smem>>
    %58 = vector.broadcast %57 : f32 to vector<8x64xf32>
    %59 = arith.addf %56, %58 : vector<8x64xf32>
    %60 = arith.negf %59 : vector<8x64xf32>
    %61 = math.exp %60 : vector<8x64xf32>
    %cst_52 = arith.constant 1.000000e+00 : f32
    %62 = vector.broadcast %cst_52 : f32 to vector<8x64xf32>
    %63 = arith.addf %62, %61 : vector<8x64xf32>
    %64 = arith.divf %62, %63 : vector<8x64xf32>
    %65 = vector.shape_cast %64 : vector<8x64xf32> to vector<8x1x64xf32>
    %66 = vector.broadcast %65 : vector<8x1x64xf32> to vector<8x16x64xf32>
    %67 = arith.mulf %0, %66 : vector<8x16x64xf32>
    %68 = arith.addf %49, %67 : vector<8x16x64xf32>
    %cst_53 = arith.constant dense<0.000000e+00> : vector<8x64xf32>
    %69 = vector.multi_reduction <add>, %68, %cst_53 [1] : vector<8x16x64xf32> to vector<8x64xf32>
    %70 = vector.shape_cast %69 : vector<8x64xf32> to vector<8x1x64xf32>
    %cst_54 = arith.constant 1.600000e+01 : f32
    %71 = vector.broadcast %cst_54 : f32 to vector<8x1x64xf32>
    %72 = arith.divf %70, %71 : vector<8x1x64xf32>
    %73 = vector.broadcast %72 : vector<8x1x64xf32> to vector<8x16x64xf32>
    %74 = arith.subf %68, %73 : vector<8x16x64xf32>
    %75 = arith.mulf %74, %74 : vector<8x16x64xf32>
    %cst_55 = arith.constant dense<0.000000e+00> : vector<8x64xf32>
    %76 = vector.multi_reduction <add>, %75, %cst_55 [1] : vector<8x16x64xf32> to vector<8x64xf32>
    %77 = vector.shape_cast %76 : vector<8x64xf32> to vector<8x1x64xf32>
    %cst_56 = arith.constant 1.600000e+01 : f32
    %78 = vector.broadcast %cst_56 : f32 to vector<8x1x64xf32>
    %79 = arith.divf %77, %78 : vector<8x1x64xf32>
    %cst_57 = arith.constant 9.99999974E-6 : f32
    %80 = vector.broadcast %cst_57 : f32 to vector<8x1x64xf32>
    %81 = arith.addf %79, %80 : vector<8x1x64xf32>
    %82 = math.rsqrt %81 : vector<8x1x64xf32>
    %83 = vector.broadcast %82 : vector<8x1x64xf32> to vector<8x16x64xf32>
    %84 = arith.mulf %74, %83 : vector<8x16x64xf32>
    %c0_58 = arith.constant 0 : index
    %c0_59 = arith.constant 0 : index
    %85 = vector.load %arg5[%c0_58, %c0_59] : memref<16x1xf32, #tpu.memory_space<vmem>>, vector<16x1xf32>
    %86 = vector.shape_cast %85 : vector<16x1xf32> to vector<1x16x1xf32>
    %87 = vector.broadcast %86 : vector<1x16x1xf32> to vector<8x16x64xf32>
    %88 = arith.mulf %84, %87 : vector<8x16x64xf32>
    %c0_60 = arith.constant 0 : index
    %c0_61 = arith.constant 0 : index
    %89 = vector.load %arg6[%c0_60, %c0_61] : memref<16x1xf32, #tpu.memory_space<vmem>>, vector<16x1xf32>
    %90 = vector.shape_cast %89 : vector<16x1xf32> to vector<1x16x1xf32>
    %91 = vector.broadcast %90 : vector<1x16x1xf32> to vector<8x16x64xf32>
    %92 = arith.addf %88, %91 : vector<8x16x64xf32>
    %93 = vector.shape_cast %92 : vector<8x16x64xf32> to vector<128x64xf32>
    %c0_62 = arith.constant 0 : index
    %c0_63 = arith.constant 0 : index
    %94 = vector.load %arg7[%c0_62, %c0_63] : memref<64x128xf32, #tpu.memory_space<vmem>>, vector<64x128xf32>
    %cst_64 = arith.constant dense<0.000000e+00> : vector<128x128xf32>
    %95 = tpu.matmul %93, %94, %cst_64 {dimension_numbers = #tpu.dot_dimension_numbers<[1], [0], [0], [1], [0, 0, 1, 1], [], []>} : vector<128x64xf32>, vector<64x128xf32>, vector<128x128xf32> -> vector<128x128xf32>
    %c0_65 = arith.constant 0 : index
    %c0_66 = arith.constant 0 : index
    %96 = vector.load %arg8[%c0_65, %c0_66] : memref<1x128xf32, #tpu.memory_space<vmem>>, vector<1x128xf32>
    %97 = vector.broadcast %96 : vector<1x128xf32> to vector<128x128xf32>
    %98 = arith.addf %95, %97 : vector<128x128xf32>
    %cst_67 = arith.constant 5.000000e-01 : f32
    %99 = vector.broadcast %cst_67 : f32 to vector<128x128xf32>
    %100 = arith.mulf %99, %98 : vector<128x128xf32>
    %cst_68 = arith.constant 0.707106769 : f32
    %101 = vector.broadcast %cst_68 : f32 to vector<128x128xf32>
    %102 = arith.mulf %98, %101 : vector<128x128xf32>
    %103 = math.erf %102 : vector<128x128xf32>
    %cst_69 = arith.constant 1.000000e+00 : f32
    %104 = vector.broadcast %cst_69 : f32 to vector<128x128xf32>
    %105 = arith.addf %104, %103 : vector<128x128xf32>
    %106 = arith.mulf %100, %105 : vector<128x128xf32>
    %c0_70 = arith.constant 0 : index
    %c0_71 = arith.constant 0 : index
    %107 = vector.load %arg9[%c0_70, %c0_71] : memref<128x64xf32, #tpu.memory_space<vmem>>, vector<128x64xf32>
    %cst_72 = arith.constant dense<0.000000e+00> : vector<128x64xf32>
    %108 = tpu.matmul %106, %107, %cst_72 {dimension_numbers = #tpu.dot_dimension_numbers<[1], [0], [0], [1], [0, 0, 1, 1], [], []>} : vector<128x128xf32>, vector<128x64xf32>, vector<128x64xf32> -> vector<128x64xf32>
    %c0_73 = arith.constant 0 : index
    %c0_74 = arith.constant 0 : index
    %109 = vector.load %arg10[%c0_73, %c0_74] : memref<1x64xf32, #tpu.memory_space<vmem>>, vector<1x64xf32>
    %110 = vector.broadcast %109 : vector<1x64xf32> to vector<128x64xf32>
    %111 = arith.addf %108, %110 : vector<128x64xf32>
    %112 = vector.shape_cast %111 : vector<128x64xf32> to vector<8x16x64xf32>
    %113 = arith.addf %112, %49 : vector<8x16x64xf32>
    %c0_75 = arith.constant 0 : index
    %c0_76 = arith.constant 0 : index
    %c0_77 = arith.constant 0 : index
    %114 = vector.load %arg11[%c0_75, %c0_76, %c0_77] : memref<8x16x64xf32, #tpu.memory_space<vmem>>, vector<8x16x64xf32>
    tpu.vector_store %arg11[%c0_75, %c0_76, %c0_77], %113 {strides = array<i32>} : memref<8x16x64xf32, #tpu.memory_space<vmem>>, vector<8x16x64xf32>,
    return
  }
  func.func @transform_0(%arg0: i32) -> (i32, i32, i32) {
    %c0_i32 = arith.constant 0 : i32
    %c0_i32_0 = arith.constant 0 : i32
    %c0_i32_1 = arith.constant 0 : i32
    return %arg0, %c0_i32, %c0_i32_0 : i32, i32, i32
  }
  func.func @transform_1(%arg0: i32) -> (i32, i32, i32) {
    %c0_i32 = arith.constant 0 : i32
    %c0_i32_0 = arith.constant 0 : i32
    %c0_i32_1 = arith.constant 0 : i32
    return %arg0, %c0_i32, %c0_i32_0 : i32, i32, i32
  }
  func.func @transform_2(%arg0: i32) -> (i32, i32) {
    %c0_i32 = arith.constant 0 : i32
    %c0_i32_0 = arith.constant 0 : i32
    %c0_i32_1 = arith.constant 0 : i32
    return %c0_i32, %c0_i32_0 : i32, i32
  }
  func.func @transform_3(%arg0: i32) -> i32 {
    %c0_i32 = arith.constant 0 : i32
    %c0_i32_0 = arith.constant 0 : i32
    return %c0_i32 : i32
  }
  func.func @transform_4(%arg0: i32) -> (i32, i32) {
    %c0_i32 = arith.constant 0 : i32
    %c0_i32_0 = arith.constant 0 : i32
    %c0_i32_1 = arith.constant 0 : i32
    return %c0_i32, %c0_i32_0 : i32, i32
  }
  func.func @transform_5(%arg0: i32) -> (i32, i32) {
    %c0_i32 = arith.constant 0 : i32
    %c0_i32_0 = arith.constant 0 : i32
    %c0_i32_1 = arith.constant 0 : i32
    return %c0_i32, %c0_i32_0 : i32, i32
  }
  func.func @transform_6(%arg0: i32) -> (i32, i32) {
    %c0_i32 = arith.constant 0 : i32
    %c0_i32_0 = arith.constant 0 : i32
    %c0_i32_1 = arith.constant 0 : i32
    return %c0_i32, %c0_i32_0 : i32, i32
  }
  func.func @transform_7(%arg0: i32) -> (i32, i32) {
    %c0_i32 = arith.constant 0 : i32
    %c0_i32_0 = arith.constant 0 : i32
    %c0_i32_1 = arith.constant 0 : i32
    return %c0_i32, %c0_i32_0 : i32, i32
  }
  func.func @transform_8(%arg0: i32) -> (i32, i32) {
    %c0_i32 = arith.constant 0 : i32
    %c0_i32_0 = arith.constant 0 : i32
    %c0_i32_1 = arith.constant 0 : i32
    return %c0_i32, %c0_i32_0 : i32, i32
  }
  func.func @transform_9(%arg0: i32) -> (i32, i32) {
    %c0_i32 = arith.constant 0 : i32
    %c0_i32_0 = arith.constant 0 : i32
    %c0_i32_1 = arith.constant 0 : i32
    return %c0_i32, %c0_i32_0 : i32, i32
  }
  func.func @transform_10(%arg0: i32) -> (i32, i32, i32) {
    %c0_i32 = arith.constant 0 : i32
    %c0_i32_0 = arith.constant 0 : i32
    %c0_i32_1 = arith.constant 0 : i32
    return %arg0, %c0_i32, %c0_i32_0 : i32, i32, i32
  }
}

</mosaic_0001>

<llo_original>
// kernel: token_mixer_forward.1
$region0: #{token_mixer_forward.1}
  #allocation0 [shape = 'u32[]', space=smem, size = 0x4, offset = 0x4, fixed_abs, tag = 'smem constant byte address 0x4 - core index']
  #allocation1 [shape = 'u32[144,128]{1,0:T(1,128)}', space=vmem, size = 0x12000, scoped, tag = 'internal scratch']
  #allocation2 [shape = 'f32[8,16,64]{2,1,0:T(8,128)}', space=vmem, size = 0x10000, scoped, tag = 'scratch operand']
  #allocation3 [shape = 'f32[1]{0:T(128)S(6)}', space=smem, size = 0x200, scoped, tag = 'scoped memory for token_mixer_forward.1']
  %s0 = inlined_call_operand.vmem [shape: f32[16,64,16], index: 0, kind: input, shape index: {}]
  %s1 = inlined_call_operand.vmem [shape: f32[16,16,64], index: 1, kind: input, shape index: {}]
  %s2 = inlined_call_operand.vmem [shape: f32[128,64], index: 2, kind: input, shape index: {}]
  %s3 = inlined_call_operand.<no memory space> [shape: f32[1], index: 3, kind: input, shape index: {}]
  %s4 = inlined_call_operand.vmem [shape: f32[16,1], index: 4, kind: input, shape index: {}]
  %s5 = inlined_call_operand.vmem [shape: f32[16,1], index: 5, kind: input, shape index: {}]
  %s6 = inlined_call_operand.vmem [shape: f32[64,128], index: 6, kind: input, shape index: {}]
  %s7 = inlined_call_operand.vmem [shape: f32[1,128], index: 7, kind: input, shape index: {}]
  %s8 = inlined_call_operand.vmem [shape: f32[128,64], index: 8, kind: input, shape index: {}]
  %s9 = inlined_call_operand.vmem [shape: f32[1,64], index: 9, kind: input, shape index: {}]
  %s10 = inlined_call_operand.hbm [shape: f32[16,16,64], index: 10, kind: output, shape index: {}]
  %s11 = sld [smem:[#allocation0]]
  $region73: #{token_mixer_forward.1} parent=0
    _
  %s13 = ssub.s32 1, %s11
  %s14 = scalar_select 0, %s13, %s11
  %15 = sst [smem:[#allocation3]] %s3
  $region1: #{token_mixer_forward.1} parent=0
    #allocation4 [shape = 'u8[131072]{0}', space=vmem, size = 0x20000, scoped, tag = 'output window, operand 0']
    #allocation5 [shape = 's32[2]{0}', space=sflag, size = 0x8, scoped, tag = 'scoped memory for token_mixer_forward.1']
    %16 = vsyncpa [#allocation5], 0
    %s17 = scalar_lea.sflag [#allocation5], 1
    %18 = vsyncpa %s17, 0
    loop: start=0, step=1, limit=4
    $region2: #{token_mixer_forward.1} parent=1 // loop_pre_header
      _
    $region3: #{token_mixer_forward.1} parent=1 // loop_header
      %s20 = sphi 0, %s24
      %p21 = scmp.ge.s32.totalorder %s20, 4
      %s30 = sphi 0, %s32
      %s33 = sphi 0, %s30
      %s34 = sphi 0, %s33
      %s50 = sphi 0, %s34
      %s56 = sphi 0, %s58
      %s59 = sphi 0, %s56
      %s60 = sphi 0, %s59
      %s76 = sphi 0, %s60
      %s80 = sphi 0, %s80
      %s82 = sphi 0, %s80
      %s83 = sphi 0, %s82
      %s97 = sphi 0, %s83
      %s101 = sphi 0, %s101
      %s103 = sphi 0, %s101
      %s104 = sphi 0, %s103
      %s118 = sphi 0, %s104
      %s122 = sphi 0, %s122
      %s124 = sphi 0, %s122
      %s125 = sphi 0, %s124
      %s139 = sphi 0, %s125
      %s143 = sphi 0, %s143
      %s145 = sphi 0, %s143
      %s146 = sphi 0, %s145
      %s160 = sphi 0, %s146
      %s164 = sphi 0, %s164
      %s166 = sphi 0, %s164
      %s167 = sphi 0, %s166
      %s181 = sphi 0, %s167
      %s185 = sphi 0, %s185
      %s187 = sphi 0, %s185
      %s188 = sphi 0, %s187
      %s202 = sphi 0, %s188
      %s206 = sphi 0, %s206
      %s208 = sphi 0, %s206
      %s209 = sphi 0, %s208
      %s223 = sphi 0, %s209
      %s227 = sphi 0, %s227
      %s229 = sphi 0, %s227
      %s230 = sphi 0, %s229
      %s244 = sphi 0, %s230
      %s250 = sphi 0, %s252
      %s253 = sphi 0, %s250
      %s254 = sphi 0, %s253
      %s270 = sphi 0, %s254
    $region4: #{token_mixer_forward.1} parent=1 // loop_header_branch
      %23 = sbr.rel (%p21) target = $region8
    $region5: #{token_mixer_forward.1} parent=1 // loop_body
      %s25 = ssub.s32 %s20, 1
      %s26 = ssub.s32 %s20, 2
      %s27 = sadd.s32 %s20, 1
      %s28 = ssub.s32 %s20, %s27
      %p29 = scmp.eq.s32.totalorder %s28, 0
      %s31 = sadd.s32 %s30, 1
      %s32 = scalar_select %p29, %s30, %s31
      %p35 = pneg %p29
      %p36 = scmp.eq.s32.totalorder %s20, 1
      %p37 = por %p35, %p36
      %p38 = scmp.ne.s32.totalorder %s30, %s33
      %p39 = scmp.eq.s32.totalorder %s20, 0
      %p40 = por %p38, %p39
      %p41 = scmp.ne.s32.totalorder %s30, %s33
      %p42 = scmp.eq.s32.totalorder %s25, 1
      %p43 = por %p41, %p42
      %p44 = scmp.ne.s32.totalorder %s33, %s34
      %p45 = scmp.eq.s32.totalorder %s25, 0
      %p46 = por %p44, %p45
      %p47 = scmp.ne.s32.totalorder %s33, %s34
      %p48 = scmp.eq.s32.totalorder %s26, 1
      %p49 = por %p47, %p48
      %p51 = scmp.ne.s32.totalorder %s34, %s50
      %p52 = scmp.eq.s32.totalorder %s26, 0
      %p53 = por %p51, %p52
      %s54 = ssub.s32 %s20, %s27
      %p55 = scmp.eq.s32.totalorder %s54, 0
      %s57 = sadd.s32 %s56, 1
      %s58 = scalar_select %p55, %s56, %s57
      %p61 = pneg %p55
      %p62 = scmp.eq.s32.totalorder %s20, 1
      %p63 = por %p61, %p62
      %p64 = scmp.ne.s32.totalorder %s56, %s59
      %p65 = scmp.eq.s32.totalorder %s20, 0
      %p66 = por %p64, %p65
      %p67 = scmp.ne.s32.totalorder %s56, %s59
      %p68 = scmp.eq.s32.totalorder %s25, 1
      %p69 = por %p67, %p68
      %p70 = scmp.ne.s32.totalorder %s59, %s60
      %p71 = scmp.eq.s32.totalorder %s25, 0
      %p72 = por %p70, %p71
      %p73 = scmp.ne.s32.totalorder %s59, %s60
      %p74 = scmp.eq.s32.totalorder %s26, 1
      %p75 = por %p73, %p74
      %p77 = scmp.ne.s32.totalorder %s60, %s76
      %p78 = scmp.eq.s32.totalorder %s26, 0
      %p79 = por %p77, %p78
      %s81 = sadd.s32 %s80, 1
      %p84 = scmp.eq.s32.totalorder %s20, 1
      %p85 = scmp.ne.s32.totalorder %s80, %s82
      %p86 = scmp.eq.s32.totalorder %s20, 0
      %p87 = por %p85, %p86
      %p88 = scmp.ne.s32.totalorder %s80, %s82
      %p89 = scmp.eq.s32.totalorder %s25, 1
      %p90 = por %p88, %p89
      %p91 = scmp.ne.s32.totalorder %s82, %s83
      %p92 = scmp.eq.s32.totalorder %s25, 0
      %p93 = por %p91, %p92
      %p94 = scmp.ne.s32.totalorder %s82, %s83
      %p95 = scmp.eq.s32.totalorder %s26, 1
      %p96 = por %p94, %p95
      %p98 = scmp.ne.s32.totalorder %s83, %s97
      %p99 = scmp.eq.s32.totalorder %s26, 0
      %p100 = por %p98, %p99
      %s102 = sadd.s32 %s101, 1
      %p105 = scmp.eq.s32.totalorder %s20, 1
      %p106 = scmp.ne.s32.totalorder %s101, %s103
      %p107 = scmp.eq.s32.totalorder %s20, 0
      %p108 = por %p106, %p107
      %p109 = scmp.ne.s32.totalorder %s101, %s103
      %p110 = scmp.eq.s32.totalorder %s25, 1
      %p111 = por %p109, %p110
      %p112 = scmp.ne.s32.totalorder %s103, %s104
      %p113 = scmp.eq.s32.totalorder %s25, 0
      %p114 = por %p112, %p113
      %p115 = scmp.ne.s32.totalorder %s103, %s104
      %p116 = scmp.eq.s32.totalorder %s26, 1
      %p117 = por %p115, %p116
      %p119 = scmp.ne.s32.totalorder %s104, %s118
      %p120 = scmp.eq.s32.totalorder %s26, 0
      %p121 = por %p119, %p120
      %s123 = sadd.s32 %s122, 1
      %p126 = scmp.eq.s32.totalorder %s20, 1
      %p127 = scmp.ne.s32.totalorder %s122, %s124
      %p128 = scmp.eq.s32.totalorder %s20, 0
      %p129 = por %p127, %p128
      %p130 = scmp.ne.s32.totalorder %s122, %s124
      %p131 = scmp.eq.s32.totalorder %s25, 1
      %p132 = por %p130, %p131
      %p133 = scmp.ne.s32.totalorder %s124, %s125
      %p134 = scmp.eq.s32.totalorder %s25, 0
      %p135 = por %p133, %p134
      %p136 = scmp.ne.s32.totalorder %s124, %s125
      %p137 = scmp.eq.s32.totalorder %s26, 1
      %p138 = por %p136, %p137
      %p140 = scmp.ne.s32.totalorder %s125, %s139
      %p141 = scmp.eq.s32.totalorder %s26, 0
      %p142 = por %p140, %p141
      %s144 = sadd.s32 %s143, 1
      %p147 = scmp.eq.s32.totalorder %s20, 1
      %p148 = scmp.ne.s32.totalorder %s143, %s145
      %p149 = scmp.eq.s32.totalorder %s20, 0
      %p150 = por %p148, %p149
      %p151 = scmp.ne.s32.totalorder %s143, %s145
      %p152 = scmp.eq.s32.totalorder %s25, 1
      %p153 = por %p151, %p152
      %p154 = scmp.ne.s32.totalorder %s145, %s146
      %p155 = scmp.eq.s32.totalorder %s25, 0
      %p156 = por %p154, %p155
      %p157 = scmp.ne.s32.totalorder %s145, %s146
      %p158 = scmp.eq.s32.totalorder %s26, 1
      %p159 = por %p157, %p158
      %p161 = scmp.ne.s32.totalorder %s146, %s160
      %p162 = scmp.eq.s32.totalorder %s26, 0
      %p163 = por %p161, %p162
      %s165 = sadd.s32 %s164, 1
      %p168 = scmp.eq.s32.totalorder %s20, 1
      %p169 = scmp.ne.s32.totalorder %s164, %s166
      %p170 = scmp.eq.s32.totalorder %s20, 0
      %p171 = por %p169, %p170
      %p172 = scmp.ne.s32.totalorder %s164, %s166
      %p173 = scmp.eq.s32.totalorder %s25, 1
      %p174 = por %p172, %p173
      %p175 = scmp.ne.s32.totalorder %s166, %s167
      %p176 = scmp.eq.s32.totalorder %s25, 0
      %p177 = por %p175, %p176
      %p178 = scmp.ne.s32.totalorder %s166, %s167
      %p179 = scmp.eq.s32.totalorder %s26, 1
      %p180 = por %p178, %p179
      %p182 = scmp.ne.s32.totalorder %s167, %s181
      %p183 = scmp.eq.s32.totalorder %s26, 0
      %p184 = por %p182, %p183
      %s186 = sadd.s32 %s185, 1
      %p189 = scmp.eq.s32.totalorder %s20, 1
      %p190 = scmp.ne.s32.totalorder %s185, %s187
      %p191 = scmp.eq.s32.totalorder %s20, 0
      %p192 = por %p190, %p191
      %p193 = scmp.ne.s32.totalorder %s185, %s187
      %p194 = scmp.eq.s32.totalorder %s25, 1
      %p195 = por %p193, %p194
      %p196 = scmp.ne.s32.totalorder %s187, %s188
      %p197 = scmp.eq.s32.totalorder %s25, 0
      %p198 = por %p196, %p197
      %p199 = scmp.ne.s32.totalorder %s187, %s188
      %p200 = scmp.eq.s32.totalorder %s26, 1
      %p201 = por %p199, %p200
      %p203 = scmp.ne.s32.totalorder %s188, %s202
      %p204 = scmp.eq.s32.totalorder %s26, 0
      %p205 = por %p203, %p204
      %s207 = sadd.s32 %s206, 1
      %p210 = scmp.eq.s32.totalorder %s20, 1
      %p211 = scmp.ne.s32.totalorder %s206, %s208
      %p212 = scmp.eq.s32.totalorder %s20, 0
      %p213 = por %p211, %p212
      %p214 = scmp.ne.s32.totalorder %s206, %s208
      %p215 = scmp.eq.s32.totalorder %s25, 1
      %p216 = por %p214, %p215
      %p217 = scmp.ne.s32.totalorder %s208, %s209
      %p218 = scmp.eq.s32.totalorder %s25, 0
      %p219 = por %p217, %p218
      %p220 = scmp.ne.s32.totalorder %s208, %s209
      %p221 = scmp.eq.s32.totalorder %s26, 1
      %p222 = por %p220, %p221
      %p224 = scmp.ne.s32.totalorder %s209, %s223
      %p225 = scmp.eq.s32.totalorder %s26, 0
      %p226 = por %p224, %p225
      %s228 = sadd.s32 %s227, 1
      %p231 = scmp.eq.s32.totalorder %s20, 1
      %p232 = scmp.ne.s32.totalorder %s227, %s229
      %p233 = scmp.eq.s32.totalorder %s20, 0
      %p234 = por %p232, %p233
      %p235 = scmp.ne.s32.totalorder %s227, %s229
      %p236 = scmp.eq.s32.totalorder %s25, 1
      %p237 = por %p235, %p236
      %p238 = scmp.ne.s32.totalorder %s229, %s230
      %p239 = scmp.eq.s32.totalorder %s25, 0
      %p240 = por %p238, %p239
      %p241 = scmp.ne.s32.totalorder %s229, %s230
      %p242 = scmp.eq.s32.totalorder %s26, 1
      %p243 = por %p241, %p242
      %p245 = scmp.ne.s32.totalorder %s230, %s244
      %p246 = scmp.eq.s32.totalorder %s26, 0
      %p247 = por %p245, %p246
      %s248 = ssub.s32 %s20, %s27
      %p249 = scmp.eq.s32.totalorder %s248, 0
      %s251 = sadd.s32 %s250, 1
      %s252 = scalar_select %p249, %s250, %s251
      %p255 = pneg %p249
      %p256 = scmp.eq.s32.totalorder %s20, 1
      %p257 = por %p255, %p256
      %p258 = scmp.ne.s32.totalorder %s250, %s253
      %p259 = scmp.eq.s32.totalorder %s20, 0
      %p260 = por %p258, %p259
      %p261 = scmp.ne.s32.totalorder %s250, %s253
      %p262 = scmp.eq.s32.totalorder %s25, 1
      %p263 = por %p261, %p262
      %p264 = scmp.ne.s32.totalorder %s253, %s254
      %p265 = scmp.eq.s32.totalorder %s25, 0
      %p266 = por %p264, %p265
      %p267 = scmp.ne.s32.totalorder %s253, %s254
      %p268 = scmp.eq.s32.totalorder %s26, 1
      %p269 = por %p267, %p268
      %p271 = scmp.ne.s32.totalorder %s254, %s270
      %p272 = scmp.eq.s32.totalorder %s26, 0
      %p273 = por %p271, %p272
      %p274 = scmp.le.s32.totalorder 1, %s20
      %p275 = scmp.lt.s32.totalorder %s20, 3
      %p276 = pnand %p274, %p275
      %p277 = pneg %p276
      // Predicated region
      $region9: #{token_mixer_forward.1} parent=5 // pred_check
        _
      $region10: #{token_mixer_forward.1} parent=5 // pred_check_branch
        %279 = sbr.rel (%p276) target = $region12
      $region11: #{token_mixer_forward.1} parent=5 // pred_region
        %s280 = ssub.s32 %s20, 1
        // Predicated region
        $region13: #{token_mixer_forward.1} parent=11 // pred_check
          %p281 = pneg %p93
        $region14: #{token_mixer_forward.1} parent=11 // pred_check_branch
          %283 = sbr.rel (%p281) target = $region16
        $region15: #{token_mixer_forward.1} parent=11 // pred_region
          _
        $region16: #{token_mixer_forward.1} parent=11 // pred_fallthru
          _
        // Predicated region
        $region17: #{token_mixer_forward.1} parent=11 // pred_check
          %p284 = pneg %p114
        $region18: #{token_mixer_forward.1} parent=11 // pred_check_branch
          %286 = sbr.rel (%p284) target = $region20
        $region19: #{token_mixer_forward.1} parent=11 // pred_region
          _
        $region20: #{token_mixer_forward.1} parent=11 // pred_fallthru
          _
        // Predicated region
        $region21: #{token_mixer_forward.1} parent=11 // pred_check
          %p287 = pneg %p135
        $region22: #{token_mixer_forward.1} parent=11 // pred_check_branch
          %289 = sbr.rel (%p287) target = $region24
        $region23: #{token_mixer_forward.1} parent=11 // pred_region
          _
        $region24: #{token_mixer_forward.1} parent=11 // pred_fallthru
          _
        // Predicated region
        $region25: #{token_mixer_forward.1} parent=11 // pred_check
          %p290 = pneg %p156
        $region26: #{token_mixer_forward.1} parent=11 // pred_check_branch
          %292 = sbr.rel (%p290) target = $region28
        $region27: #{token_mixer_forward.1} parent=11 // pred_region
          _
        $region28: #{token_mixer_forward.1} parent=11 // pred_fallthru
          _
        // Predicated region
        $region29: #{token_mixer_forward.1} parent=11 // pred_check
          %p293 = pneg %p177
        $region30: #{token_mixer_forward.1} parent=11 // pred_check_branch
          %295 = sbr.rel (%p293) target = $region32
        $region31: #{token_mixer_forward.1} parent=11 // pred_region
          _
        $region32: #{token_mixer_forward.1} parent=11 // pred_fallthru
          _
        // Predicated region
        $region33: #{token_mixer_forward.1} parent=11 // pred_check
          %p296 = pneg %p198
        $region34: #{token_mixer_forward.1} parent=11 // pred_check_branch
          %298 = sbr.rel (%p296) target = $region36
        $region35: #{token_mixer_forward.1} parent=11 // pred_region
          _
        $region36: #{token_mixer_forward.1} parent=11 // pred_fallthru
          _
        // Predicated region
        $region37: #{token_mixer_forward.1} parent=11 // pred_check
          %p299 = pneg %p219
        $region38: #{token_mixer_forward.1} parent=11 // pred_check_branch
          %301 = sbr.rel (%p299) target = $region40
        $region39: #{token_mixer_forward.1} parent=11 // pred_region
          _
        $region40: #{token_mixer_forward.1} parent=11 // pred_fallthru
          _
        // Predicated region
        $region41: #{token_mixer_forward.1} parent=11 // pred_check
          %p302 = pneg %p240
        $region42: #{token_mixer_forward.1} parent=11 // pred_check_branch
          %304 = sbr.rel (%p302) target = $region44
        $region43: #{token_mixer_forward.1} parent=11 // pred_region
          _
        $region44: #{token_mixer_forward.1} parent=11 // pred_fallthru
          _
      $region12: #{token_mixer_forward.1} parent=5 // pred_fallthru
        _
      %p305 = scmp.lt.s32.totalorder %s20, 2
      // Predicated region
      $region45: #{token_mixer_forward.1} parent=5 // pred_check
        %p306 = pneg %p305
      $region46: #{token_mixer_forward.1} parent=5 // pred_check_branch
        %308 = sbr.rel (%p306) target = $region48
      $region47: #{token_mixer_forward.1} parent=5 // pred_region
        // Predicated region
        $region49: #{token_mixer_forward.1} parent=47 // pred_check
          %p309 = pneg %p40
        $region50: #{token_mixer_forward.1} parent=47 // pred_check_branch
          %311 = sbr.rel (%p309) target = $region52
        $region51: #{token_mixer_forward.1} parent=47 // pred_region
          %s312 = smul.u32 8, %s20
          %p313 = scmp.lt.s32.totalorder %s312, 15
          %s314 = scalar_select %p313, %s312, 15
          %s315 = smul.addr %s314, 8
          %s316 = smul.addr %s315, 8
          %s317 = scalar_lea.vmem %s0, %s316
          %s318 = smul.u32 8, %s20
        $region52: #{token_mixer_forward.1} parent=47 // pred_fallthru
          _
        // Predicated region
        $region53: #{token_mixer_forward.1} parent=47 // pred_check
          %p319 = pneg %p66
        $region54: #{token_mixer_forward.1} parent=47 // pred_check_branch
          %321 = sbr.rel (%p319) target = $region56
        $region55: #{token_mixer_forward.1} parent=47 // pred_region
          %s322 = smul.u32 8, %s20
          %p323 = scmp.lt.s32.totalorder %s322, 15
          %s324 = scalar_select %p323, %s322, 15
          %s325 = smul.addr %s324, 2
          %s326 = smul.addr %s325, 8
          %s327 = scalar_lea.vmem %s1, %s326
          %s328 = smul.u32 8, %s20
        $region56: #{token_mixer_forward.1} parent=47 // pred_fallthru
          _
      $region48: #{token_mixer_forward.1} parent=5 // pred_fallthru
        _
      %p329 = scmp.le.s32.totalorder 1, %s20
      %p330 = scmp.lt.s32.totalorder %s20, 3
      %p331 = pnand %p329, %p330
      %p332 = pneg %p331
      // Predicated region
      $region57: #{token_mixer_forward.1} parent=5 // pred_check
        _
      $region58: #{token_mixer_forward.1} parent=5 // pred_check_branch
        %334 = sbr.rel (%p331) target = $region60
      $region59: #{token_mixer_forward.1} parent=5 // pred_region
        %s335 = ssub.s32 %s20, 1
        %s336 = smul.u32 8, %s25
        %p337 = scmp.lt.s32.totalorder %s336, 15
        %s338 = scalar_select %p337, %s336, 15
        %s339 = smul.addr %s338, 8
        %s340 = smul.addr %s339, 8
        %s341 = scalar_lea.vmem %s0, %s340
        %p342 = pneg %p46
        %p343 = pneg %p43
        %s344 = smul.u32 8, %s25
        %p345 = scmp.lt.s32.totalorder %s344, 15
        %s346 = scalar_select %p345, %s344, 15
        %s347 = smul.addr %s346, 2
        %s348 = smul.addr %s347, 8
        %s349 = scalar_lea.vmem %s1, %s348
        %p350 = pneg %p72
        %p351 = pneg %p69
        %p352 = pneg %p93
        %p353 = pneg %p90
        %p354 = pneg %p114
        %p355 = pneg %p111
        %p356 = pneg %p135
        %p357 = pneg %p132
        %p358 = pneg %p156
        %p359 = pneg %p153
        %p360 = pneg %p177
        %p361 = pneg %p174
        %p362 = pneg %p198
        %p363 = pneg %p195
        %p364 = pneg %p219
        %p365 = pneg %p216
        %p366 = pneg %p240
        %p367 = pneg %p237
        %p368 = pneg %p266
        %p369 = pneg %p263
        %s370 = sand.u32 %s253, 1
        %s371 = scalar_lea.sflag [#allocation5], %s370
        %s372 = sand.u32 %s253, 1
        %s373 = smul.addr %s372, 128
        %s374 = scalar_lea.vmem [#allocation4], %s373
        %s375 = smul.u32 8, %s25
        %p376 = scmp.lt.s32.totalorder %s375, 15
        %s377 = scalar_select %p376, %s375, 15
        %s378 = smul.addr %s377, 8
        %s379 = smul.addr %s378, 8
        %s380 = scalar_lea.vmem %s0, %s379
        %s381 = smul.u32 8, %s25
        %s382 = smul.u32 8, %s25
        %p383 = scmp.lt.s32.totalorder %s382, 15
        %s384 = scalar_select %p383, %s382, 15
        %s385 = smul.addr %s384, 2
        %s386 = smul.addr %s385, 8
        %s387 = scalar_lea.vmem %s1, %s386
        %s388 = smul.u32 8, %s25
        %s389 = smul.u32 8, %s25
        %v390 = vld [vmem:[%s387] sm:$0xff]
        %v391 = vld [vmem:[%s387 + $0x8] sm:$0xff]
        %v392 = vld [vmem:[%s387 + $0x10] sm:$0xff]
        %v393 = vld [vmem:[%s387 + $0x18] sm:$0xff]
        %v394 = vld [vmem:[%s387 + $0x20] sm:$0xff]
        %v395 = vld [vmem:[%s387 + $0x28] sm:$0xff]
        %v396 = vld [vmem:[%s387 + $0x30] sm:$0xff]
        %v397 = vld [vmem:[%s387 + $0x38] sm:$0xff]
        %v398 = vld [vmem:[%s387 + $0x40] sm:$0xff]
        %v399 = vld [vmem:[%s387 + $0x48] sm:$0xff]
        %v400 = vld [vmem:[%s387 + $0x50] sm:$0xff]
        %v401 = vld [vmem:[%s387 + $0x58] sm:$0xff]
        %v402 = vld [vmem:[%s387 + $0x60] sm:$0xff]
        %v403 = vld [vmem:[%s387 + $0x68] sm:$0xff]
        %v404 = vld [vmem:[%s387 + $0x70] sm:$0xff]
        %v405 = vld [vmem:[%s387 + $0x78] sm:$0xff]
        %v406 = vld [vmem:[%s380] sm:$0xff]
        %v407 = vld [vmem:[%s380 + $0x8] sm:$0xff]
        %v408 = vld [vmem:[%s380 + $0x10] sm:$0xff]
        %v409 = vld [vmem:[%s380 + $0x18] sm:$0xff]
        %v410 = vld [vmem:[%s380 + $0x20] sm:$0xff]
        %v411 = vld [vmem:[%s380 + $0x28] sm:$0xff]
        %v412 = vld [vmem:[%s380 + $0x30] sm:$0xff]
        %v413 = vld [vmem:[%s380 + $0x38] sm:$0xff]
        %414 = vxpose.xlu0.b32.start [1/16] %v406, 128
        %415 = vxpose.xlu0.b32.cont [2/16] %v407, 128
        %416 = vxpose.xlu0.b32.cont [3/16] %v408, 128
        %417 = vxpose.xlu0.b32.cont [4/16] %v409, 128
        %418 = vxpose.xlu0.b32.cont [5/16] %v410, 128
        %419 = vxpose.xlu0.b32.cont [6/16] %v411, 128
        %420 = vxpose.xlu0.b32.cont [7/16] %v412, 128
        %421 = vxpose.xlu0.b32.cont [8/16] %v413, 128
        %422 = vxpose.xlu0.b32.cont [9/16] 0.0, 128
        %423 = vxpose.xlu0.b32.cont [10/16] 0.0, 128
        %424 = vxpose.xlu0.b32.cont [11/16] 0.0, 128
        %425 = vxpose.xlu0.b32.cont [12/16] 0.0, 128
        %426 = vxpose.xlu0.b32.cont [13/16] 0.0, 128
        %427 = vxpose.xlu0.b32.cont [14/16] 0.0, 128
        %428 = vxpose.xlu0.b32.cont [15/16] 0.0, 128
        %429 = vxpose.xlu0.b32.end [16/16] 0.0, 128
        %v430 = vpop.trf.xlu0
        %v431 = vpop.trf.xlu0
        %v432 = vpop.trf.xlu0
        %v433 = vpop.trf.xlu0
        %v434 = vpop.trf.xlu0
        %v435 = vpop.trf.xlu0
        %v436 = vpop.trf.xlu0
        %v437 = vpop.trf.xlu0
        %v438 = vpop.trf.xlu0
        %v439 = vpop.trf.xlu0
        %v440 = vpop.trf.xlu0
        %v441 = vpop.trf.xlu0
        %v442 = vpop.trf.xlu0
        %v443 = vpop.trf.xlu0
        %v444 = vpop.trf.xlu0
        %v445 = vpop.trf.xlu0
        %vm446 = vcmask 523264
        %447 = vst.msk [vmem:[#allocation2] sm:$0xff] %vm446, %v430
        %448 = vst.msk [vmem:[#allocation2 + $0x8] sm:$0xff] %vm446, %v431
        %s449 = scalar_lea.vmem %s380, 64
        %v450 = vld [vmem:[%s449] sm:$0xff]
        %v451 = vld [vmem:[%s449 + $0x8] sm:$0xff]
        %v452 = vld [vmem:[%s449 + $0x10] sm:$0xff]
        %v453 = vld [vmem:[%s449 + $0x18] sm:$0xff]
        %v454 = vld [vmem:[%s449 + $0x20] sm:$0xff]
        %v455 = vld [vmem:[%s449 + $0x28] sm:$0xff]
        %v456 = vld [vmem:[%s449 + $0x30] sm:$0xff]
        %v457 = vld [vmem:[%s449 + $0x38] sm:$0xff]
        %458 = vxpose.xlu0.b32.start [1/16] %v450, 128
        %459 = vxpose.xlu0.b32.cont [2/16] %v451, 128
        %460 = vxpose.xlu0.b32.cont [3/16] %v452, 128
        %461 = vxpose.xlu0.b32.cont [4/16] %v453, 128
        %462 = vxpose.xlu0.b32.cont [5/16] %v454, 128
        %463 = vxpose.xlu0.b32.cont [6/16] %v455, 128
        %464 = vxpose.xlu0.b32.cont [7/16] %v456, 128
        %465 = vxpose.xlu0.b32.cont [8/16] %v457, 128
        %466 = vxpose.xlu0.b32.cont [9/16] 0.0, 128
        %467 = vxpose.xlu0.b32.cont [10/16] 0.0, 128
        %468 = vxpose.xlu0.b32.cont [11/16] 0.0, 128
        %469 = vxpose.xlu0.b32.cont [12/16] 0.0, 128
        %470 = vxpose.xlu0.b32.cont [13/16] 0.0, 128
        %471 = vxpose.xlu0.b32.cont [14/16] 0.0, 128
        %472 = vxpose.xlu0.b32.cont [15/16] 0.0, 128
        %473 = vxpose.xlu0.b32.end [16/16] 0.0, 128
        %v474 = vpop.trf.xlu0
        %v475 = vpop.trf.xlu0
        %v476 = vpop.trf.xlu0
        %v477 = vpop.trf.xlu0
        %v478 = vpop.trf.xlu0
        %v479 = vpop.trf.xlu0
        %v480 = vpop.trf.xlu0
        %v481 = vpop.trf.xlu0
        %v482 = vpop.trf.xlu0
        %v483 = vpop.trf.xlu0
        %v484 = vpop.trf.xlu0
        %v485 = vpop.trf.xlu0
        %v486 = vpop.trf.xlu0
        %v487 = vpop.trf.xlu0
        %v488 = vpop.trf.xlu0
        %v489 = vpop.trf.xlu0
        %s490 = scalar_lea.vmem [#allocation2], 16
        %491 = vst.msk [vmem:[%s490] sm:$0xff] %vm446, %v474
        %492 = vst.msk [vmem:[%s490 + $0x8] sm:$0xff] %vm446, %v475
        %s493 = scalar_lea.vmem %s380, 128
        %v494 = vld [vmem:[%s493] sm:$0xff]
        %v495 = vld [vmem:[%s493 + $0x8] sm:$0xff]
        %v496 = vld [vmem:[%s493 + $0x10] sm:$0xff]
        %v497 = vld [vmem:[%s493 + $0x18] sm:$0xff]
        %v498 = vld [vmem:[%s493 + $0x20] sm:$0xff]
        %v499 = vld [vmem:[%s493 + $0x28] sm:$0xff]
        %v500 = vld [vmem:[%s493 + $0x30] sm:$0xff]
        %v501 = vld [vmem:[%s493 + $0x38] sm:$0xff]
        %502 = vxpose.xlu0.b32.start [1/16] %v494, 128
        %503 = vxpose.xlu0.b32.cont [2/16] %v495, 128
        %504 = vxpose.xlu0.b32.cont [3/16] %v496, 128
        %505 = vxpose.xlu0.b32.cont [4/16] %v497, 128
        %506 = vxpose.xlu0.b32.cont [5/16] %v498, 128
        %507 = vxpose.xlu0.b32.cont [6/16] %v499, 128
        %508 = vxpose.xlu0.b32.cont [7/16] %v500, 128
        %509 = vxpose.xlu0.b32.cont [8/16] %v501, 128
        %510 = vxpose.xlu0.b32.cont [9/16] 0.0, 128
        %511 = vxpose.xlu0.b32.cont [10/16] 0.0, 128
        %512 = vxpose.xlu0.b32.cont [11/16] 0.0, 128
        %513 = vxpose.xlu0.b32.cont [12/16] 0.0, 128
        %514 = vxpose.xlu0.b32.cont [13/16] 0.0, 128
        %515 = vxpose.xlu0.b32.cont [14/16] 0.0, 128
        %516 = vxpose.xlu0.b32.cont [15/16] 0.0, 128
        %517 = vxpose.xlu0.b32.end [16/16] 0.0, 128
        %v518 = vpop.trf.xlu0
        %v519 = vpop.trf.xlu0
        %v520 = vpop.trf.xlu0
        %v521 = vpop.trf.xlu0
        %v522 = vpop.trf.xlu0
        %v523 = vpop.trf.xlu0
        %v524 = vpop.trf.xlu0
        %v525 = vpop.trf.xlu0
        %v526 = vpop.trf.xlu0
        %v527 = vpop.trf.xlu0
        %v528 = vpop.trf.xlu0
        %v529 = vpop.trf.xlu0
        %v530 = vpop.trf.xlu0
        %v531 = vpop.trf.xlu0
        %v532 = vpop.trf.xlu0
        %v533 = vpop.trf.xlu0
        %s534 = scalar_lea.vmem [#allocation2], 32
        %535 = vst.msk [vmem:[%s534] sm:$0xff] %vm446, %v518
        %536 = vst.msk [vmem:[%s534 + $0x8] sm:$0xff] %vm446, %v519
        %s537 = scalar_lea.vmem %s380, 192
        %v538 = vld [vmem:[%s537] sm:$0xff]
        %v539 = vld [vmem:[%s537 + $0x8] sm:$0xff]
        %v540 = vld [vmem:[%s537 + $0x10] sm:$0xff]
        %v541 = vld [vmem:[%s537 + $0x18] sm:$0xff]
        %v542 = vld [vmem:[%s537 + $0x20] sm:$0xff]
        %v543 = vld [vmem:[%s537 + $0x28] sm:$0xff]
        %v544 = vld [vmem:[%s537 + $0x30] sm:$0xff]
        %v545 = vld [vmem:[%s537 + $0x38] sm:$0xff]
        %546 = vxpose.xlu0.b32.start [1/16] %v538, 128
        %547 = vxpose.xlu0.b32.cont [2/16] %v539, 128
        %548 = vxpose.xlu0.b32.cont [3/16] %v540, 128
        %549 = vxpose.xlu0.b32.cont [4/16] %v541, 128
        %550 = vxpose.xlu0.b32.cont [5/16] %v542, 128
        %551 = vxpose.xlu0.b32.cont [6/16] %v543, 128
        %552 = vxpose.xlu0.b32.cont [7/16] %v544, 128
        %553 = vxpose.xlu0.b32.cont [8/16] %v545, 128
        %554 = vxpose.xlu0.b32.cont [9/16] 0.0, 128
        %555 = vxpose.xlu0.b32.cont [10/16] 0.0, 128
        %556 = vxpose.xlu0.b32.cont [11/16] 0.0, 128
        %557 = vxpose.xlu0.b32.cont [12/16] 0.0, 128
        %558 = vxpose.xlu0.b32.cont [13/16] 0.0, 128
        %559 = vxpose.xlu0.b32.cont [14/16] 0.0, 128
        %560 = vxpose.xlu0.b32.cont [15/16] 0.0, 128
        %561 = vxpose.xlu0.b32.end [16/16] 0.0, 128
        %v562 = vpop.trf.xlu0
        %v563 = vpop.trf.xlu0
        %v564 = vpop.trf.xlu0
        %v565 = vpop.trf.xlu0
        %v566 = vpop.trf.xlu0
        %v567 = vpop.trf.xlu0
        %v568 = vpop.trf.xlu0
        %v569 = vpop.trf.xlu0
        %v570 = vpop.trf.xlu0
        %v571 = vpop.trf.xlu0
        %v572 = vpop.trf.xlu0
        %v573 = vpop.trf.xlu0
        %v574 = vpop.trf.xlu0
        %v575 = vpop.trf.xlu0
        %v576 = vpop.trf.xlu0
        %v577 = vpop.trf.xlu0
        %s578 = scalar_lea.vmem [#allocation2], 48
        %579 = vst.msk [vmem:[%s578] sm:$0xff] %vm446, %v562
        %580 = vst.msk [vmem:[%s578 + $0x8] sm:$0xff] %vm446, %v563
        %s581 = scalar_lea.vmem %s380, 256
        %v582 = vld [vmem:[%s581] sm:$0xff]
        %v583 = vld [vmem:[%s581 + $0x8] sm:$0xff]
        %v584 = vld [vmem:[%s581 + $0x10] sm:$0xff]
        %v585 = vld [vmem:[%s581 + $0x18] sm:$0xff]
        %v586 = vld [vmem:[%s581 + $0x20] sm:$0xff]
        %v587 = vld [vmem:[%s581 + $0x28] sm:$0xff]
        %v588 = vld [vmem:[%s581 + $0x30] sm:$0xff]
        %v589 = vld [vmem:[%s581 + $0x38] sm:$0xff]
        %590 = vxpose.xlu0.b32.start [1/16] %v582, 128
        %591 = vxpose.xlu0.b32.cont [2/16] %v583, 128
        %592 = vxpose.xlu0.b32.cont [3/16] %v584, 128
        %593 = vxpose.xlu0.b32.cont [4/16] %v585, 128
        %594 = vxpose.xlu0.b32.cont [5/16] %v586, 128
        %595 = vxpose.xlu0.b32.cont [6/16] %v587, 128
        %596 = vxpose.xlu0.b32.cont [7/16] %v588, 128
        %597 = vxpose.xlu0.b32.cont [8/16] %v589, 128
        %598 = vxpose.xlu0.b32.cont [9/16] 0.0, 128
        %599 = vxpose.xlu0.b32.cont [10/16] 0.0, 128
        %600 = vxpose.xlu0.b32.cont [11/16] 0.0, 128
        %601 = vxpose.xlu0.b32.cont [12/16] 0.0, 128
        %602 = vxpose.xlu0.b32.cont [13/16] 0.0, 128
        %603 = vxpose.xlu0.b32.cont [14/16] 0.0, 128
        %604 = vxpose.xlu0.b32.cont [15/16] 0.0, 128
        %605 = vxpose.xlu0.b32.end [16/16] 0.0, 128
        %v606 = vpop.trf.xlu0
        %v607 = vpop.trf.xlu0
        %v608 = vpop.trf.xlu0
        %v609 = vpop.trf.xlu0
        %v610 = vpop.trf.xlu0
        %v611 = vpop.trf.xlu0
        %v612 = vpop.trf.xlu0
        %v613 = vpop.trf.xlu0
        %v614 = vpop.trf.xlu0
        %v615 = vpop.trf.xlu0
        %v616 = vpop.trf.xlu0
        %v617 = vpop.trf.xlu0
        %v618 = vpop.trf.xlu0
        %v619 = vpop.trf.xlu0
        %v620 = vpop.trf.xlu0
        %v621 = vpop.trf.xlu0
        %s622 = scalar_lea.vmem [#allocation2], 64
        %623 = vst.msk [vmem:[%s622] sm:$0xff] %vm446, %v606
        %624 = vst.msk [vmem:[%s622 + $0x8] sm:$0xff] %vm446, %v607
        %s625 = scalar_lea.vmem %s380, 320
        %v626 = vld [vmem:[%s625] sm:$0xff]
        %v627 = vld [vmem:[%s625 + $0x8] sm:$0xff]
        %v628 = vld [vmem:[%s625 + $0x10] sm:$0xff]
        %v629 = vld [vmem:[%s625 + $0x18] sm:$0xff]
        %v630 = vld [vmem:[%s625 + $0x20] sm:$0xff]
        %v631 = vld [vmem:[%s625 + $0x28] sm:$0xff]
        %v632 = vld [vmem:[%s625 + $0x30] sm:$0xff]
        %v633 = vld [vmem:[%s625 + $0x38] sm:$0xff]
        %634 = vxpose.xlu0.b32.start [1/16] %v626, 128
        %635 = vxpose.xlu0.b32.cont [2/16] %v627, 128
        %636 = vxpose.xlu0.b32.cont [3/16] %v628, 128
        %637 = vxpose.xlu0.b32.cont [4/16] %v629, 128
        %638 = vxpose.xlu0.b32.cont [5/16] %v630, 128
        %639 = vxpose.xlu0.b32.cont [6/16] %v631, 128
        %640 = vxpose.xlu0.b32.cont [7/16] %v632, 128
        %641 = vxpose.xlu0.b32.cont [8/16] %v633, 128
        %642 = vxpose.xlu0.b32.cont [9/16] 0.0, 128
        %643 = vxpose.xlu0.b32.cont [10/16] 0.0, 128
        %644 = vxpose.xlu0.b32.cont [11/16] 0.0, 128
        %645 = vxpose.xlu0.b32.cont [12/16] 0.0, 128
        %646 = vxpose.xlu0.b32.cont [13/16] 0.0, 128
        %647 = vxpose.xlu0.b32.cont [14/16] 0.0, 128
        %648 = vxpose.xlu0.b32.cont [15/16] 0.0, 128
        %649 = vxpose.xlu0.b32.end [16/16] 0.0, 128
        %v650 = vpop.trf.xlu0
        %v651 = vpop.trf.xlu0
        %v652 = vpop.trf.xlu0
        %v653 = vpop.trf.xlu0
        %v654 = vpop.trf.xlu0
        %v655 = vpop.trf.xlu0
        %v656 = vpop.trf.xlu0
        %v657 = vpop.trf.xlu0
        %v658 = vpop.trf.xlu0
        %v659 = vpop.trf.xlu0
        %v660 = vpop.trf.xlu0
        %v661 = vpop.trf.xlu0
        %v662 = vpop.trf.xlu0
        %v663 = vpop.trf.xlu0
        %v664 = vpop.trf.xlu0
        %v665 = vpop.trf.xlu0
        %s666 = scalar_lea.vmem [#allocation2], 80
        %667 = vst.msk [vmem:[%s666] sm:$0xff] %vm446, %v650
        %668 = vst.msk [vmem:[%s666 + $0x8] sm:$0xff] %vm446, %v651
        %s669 = scalar_lea.vmem %s380, 384
        %v670 = vld [vmem:[%s669] sm:$0xff]
        %v671 = vld [vmem:[%s669 + $0x8] sm:$0xff]
        %v672 = vld [vmem:[%s669 + $0x10] sm:$0xff]
        %v673 = vld [vmem:[%s669 + $0x18] sm:$0xff]
        %v674 = vld [vmem:[%s669 + $0x20] sm:$0xff]
        %v675 = vld [vmem:[%s669 + $0x28] sm:$0xff]
        %v676 = vld [vmem:[%s669 + $0x30] sm:$0xff]
        %v677 = vld [vmem:[%s669 + $0x38] sm:$0xff]
        %678 = vxpose.xlu0.b32.start [1/16] %v670, 128
        %679 = vxpose.xlu0.b32.cont [2/16] %v671, 128
        %680 = vxpose.xlu0.b32.cont [3/16] %v672, 128
        %681 = vxpose.xlu0.b32.cont [4/16] %v673, 128
        %682 = vxpose.xlu0.b32.cont [5/16] %v674, 128
        %683 = vxpose.xlu0.b32.cont [6/16] %v675, 128
        %684 = vxpose.xlu0.b32.cont [7/16] %v676, 128
        %685 = vxpose.xlu0.b32.cont [8/16] %v677, 128
        %686 = vxpose.xlu0.b32.cont [9/16] 0.0, 128
        %687 = vxpose.xlu0.b32.cont [10/16] 0.0, 128
        %688 = vxpose.xlu0.b32.cont [11/16] 0.0, 128
        %689 = vxpose.xlu0.b32.cont [12/16] 0.0, 128
        %690 = vxpose.xlu0.b32.cont [13/16] 0.0, 128
        %691 = vxpose.xlu0.b32.cont [14/16] 0.0, 128
        %692 = vxpose.xlu0.b32.cont [15/16] 0.0, 128
        %693 = vxpose.xlu0.b32.end [16/16] 0.0, 128
        %v694 = vpop.trf.xlu0
        %v695 = vpop.trf.xlu0
        %v696 = vpop.trf.xlu0
        %v697 = vpop.trf.xlu0
        %v698 = vpop.trf.xlu0
        %v699 = vpop.trf.xlu0
        %v700 = vpop.trf.xlu0
        %v701 = vpop.trf.xlu0
        %v702 = vpop.trf.xlu0
        %v703 = vpop.trf.xlu0
        %v704 = vpop.trf.xlu0
        %v705 = vpop.trf.xlu0
        %v706 = vpop.trf.xlu0
        %v707 = vpop.trf.xlu0
        %v708 = vpop.trf.xlu0
        %v709 = vpop.trf.xlu0
        %s710 = scalar_lea.vmem [#allocation2], 96
        %711 = vst.msk [vmem:[%s710] sm:$0xff] %vm446, %v694
        %712 = vst.msk [vmem:[%s710 + $0x8] sm:$0xff] %vm446, %v695
        %s713 = scalar_lea.vmem %s380, 448
        %v714 = vld [vmem:[%s713] sm:$0xff]
        %v715 = vld [vmem:[%s713 + $0x8] sm:$0xff]
        %v716 = vld [vmem:[%s713 + $0x10] sm:$0xff]
        %v717 = vld [vmem:[%s713 + $0x18] sm:$0xff]
        %v718 = vld [vmem:[%s713 + $0x20] sm:$0xff]
        %v719 = vld [vmem:[%s713 + $0x28] sm:$0xff]
        %v720 = vld [vmem:[%s713 + $0x30] sm:$0xff]
        %v721 = vld [vmem:[%s713 + $0x38] sm:$0xff]
        %722 = vxpose.xlu0.b32.start [1/16] %v714, 128
        %723 = vxpose.xlu0.b32.cont [2/16] %v715, 128
        %724 = vxpose.xlu0.b32.cont [3/16] %v716, 128
        %725 = vxpose.xlu0.b32.cont [4/16] %v717, 128
        %726 = vxpose.xlu0.b32.cont [5/16] %v718, 128
        %727 = vxpose.xlu0.b32.cont [6/16] %v719, 128
        %728 = vxpose.xlu0.b32.cont [7/16] %v720, 128
        %729 = vxpose.xlu0.b32.cont [8/16] %v721, 128
        %730 = vxpose.xlu0.b32.cont [9/16] 0.0, 128
        %731 = vxpose.xlu0.b32.cont [10/16] 0.0, 128
        %732 = vxpose.xlu0.b32.cont [11/16] 0.0, 128
        %733 = vxpose.xlu0.b32.cont [12/16] 0.0, 128
        %734 = vxpose.xlu0.b32.cont [13/16] 0.0, 128
        %735 = vxpose.xlu0.b32.cont [14/16] 0.0, 128
        %736 = vxpose.xlu0.b32.cont [15/16] 0.0, 128
        %737 = vxpose.xlu0.b32.end [16/16] 0.0, 128
        %v738 = vpop.trf.xlu0
        %v739 = vpop.trf.xlu0
        %v740 = vpop.trf.xlu0
        %v741 = vpop.trf.xlu0
        %v742 = vpop.trf.xlu0
        %v743 = vpop.trf.xlu0
        %v744 = vpop.trf.xlu0
        %v745 = vpop.trf.xlu0
        %v746 = vpop.trf.xlu0
        %v747 = vpop.trf.xlu0
        %v748 = vpop.trf.xlu0
        %v749 = vpop.trf.xlu0
        %v750 = vpop.trf.xlu0
        %v751 = vpop.trf.xlu0
        %v752 = vpop.trf.xlu0
        %v753 = vpop.trf.xlu0
        %s754 = scalar_lea.vmem [#allocation2], 112
        %755 = vst.msk [vmem:[%s754] sm:$0xff] %vm446, %v738
        %756 = vst.msk [vmem:[%s754 + $0x8] sm:$0xff] %vm446, %v739
        %v757 = vld [vmem:[#allocation2] sm:$0xff]
        %v758 = vld [vmem:[#allocation2 + $0x8] sm:$0xff]
        %v759 = vld [vmem:[#allocation2 + $0x10] sm:$0xff]
        %v760 = vld [vmem:[#allocation2 + $0x18] sm:$0xff]
        %v761 = vld [vmem:[#allocation2 + $0x20] sm:$0xff]
        %v762 = vld [vmem:[#allocation2 + $0x28] sm:$0xff]
        %v763 = vld [vmem:[#allocation2 + $0x30] sm:$0xff]
        %v764 = vld [vmem:[#allocation2 + $0x38] sm:$0xff]
        %v765 = vld [vmem:[#allocation2 + $0x40] sm:$0xff]
        %v766 = vld [vmem:[#allocation2 + $0x48] sm:$0xff]
        %v767 = vld [vmem:[#allocation2 + $0x50] sm:$0xff]
        %v768 = vld [vmem:[#allocation2 + $0x58] sm:$0xff]
        %v769 = vld [vmem:[#allocation2 + $0x60] sm:$0xff]
        %v770 = vld [vmem:[#allocation2 + $0x68] sm:$0xff]
        %v771 = vld [vmem:[#allocation2 + $0x70] sm:$0xff]
        %v772 = vld [vmem:[#allocation2 + $0x78] sm:$0xff]
        %v773 = vsel %vm446, %v390, -inf
        %v774 = vsel %vm446, %v391, -inf
        %v775 = vmax.f32 %v773, %v774
        %v776 = vrot.slane %v775, 4
        %v777 = vmax.f32 %v775, %v776
        %v778 = vrot.slane %v777, 2
        %v779 = vmax.f32 %v777, %v778
        %v780 = vrot.slane %v779, 1
        %v781 = vmax.f32 %v779, %v780
        %v782 = vsel %vm446, %v392, -inf
        %v783 = vsel %vm446, %v393, -inf
        %v784 = vmax.f32 %v782, %v783
        %v785 = vrot.slane %v784, 4
        %v786 = vmax.f32 %v784, %v785
        %v787 = vrot.slane %v786, 2
        %v788 = vmax.f32 %v786, %v787
        %v789 = vrot.slane %v788, 1
        %v790 = vmax.f32 %v788, %v789
        %v791 = vsel %vm446, %v394, -inf
        %v792 = vsel %vm446, %v395, -inf
        %v793 = vmax.f32 %v791, %v792
        %v794 = vrot.slane %v793, 4
        %v795 = vmax.f32 %v793, %v794
        %v796 = vrot.slane %v795, 2
        %v797 = vmax.f32 %v795, %v796
        %v798 = vrot.slane %v797, 1
        %v799 = vmax.f32 %v797, %v798
        %v800 = vsel %vm446, %v396, -inf
        %v801 = vsel %vm446, %v397, -inf
        %v802 = vmax.f32 %v800, %v801
        %v803 = vrot.slane %v802, 4
        %v804 = vmax.f32 %v802, %v803
        %v805 = vrot.slane %v804, 2
        %v806 = vmax.f32 %v804, %v805
        %v807 = vrot.slane %v806, 1
        %v808 = vmax.f32 %v806, %v807
        %v809 = vsel %vm446, %v398, -inf
        %v810 = vsel %vm446, %v399, -inf
        %v811 = vmax.f32 %v809, %v810
        %v812 = vrot.slane %v811, 4
        %v813 = vmax.f32 %v811, %v812
        %v814 = vrot.slane %v813, 2
        %v815 = vmax.f32 %v813, %v814
        %v816 = vrot.slane %v815, 1
        %v817 = vmax.f32 %v815, %v816
        %v818 = vsel %vm446, %v400, -inf
        %v819 = vsel %vm446, %v401, -inf
        %v820 = vmax.f32 %v818, %v819
        %v821 = vrot.slane %v820, 4
        %v822 = vmax.f32 %v820, %v821
        %v823 = vrot.slane %v822, 2
        %v824 = vmax.f32 %v822, %v823
        %v825 = vrot.slane %v824, 1
        %v826 = vmax.f32 %v824, %v825
        %v827 = vsel %vm446, %v402, -inf
        %v828 = vsel %vm446, %v403, -inf
        %v829 = vmax.f32 %v827, %v828
        %v830 = vrot.slane %v829, 4
        %v831 = vmax.f32 %v829, %v830
        %v832 = vrot.slane %v831, 2
        %v833 = vmax.f32 %v831, %v832
        %v834 = vrot.slane %v833, 1
        %v835 = vmax.f32 %v833, %v834
        %v836 = vsel %vm446, %v404, -inf
        %v837 = vsel %vm446, %v405, -inf
        %v838 = vmax.f32 %v836, %v837
        %v839 = vrot.slane %v838, 4
        %v840 = vmax.f32 %v838, %v839
        %v841 = vrot.slane %v840, 2
        %v842 = vmax.f32 %v840, %v841
        %v843 = vrot.slane %v842, 1
        %v844 = vmax.f32 %v842, %v843
        %v845 = vsel %vm446, %v390, 0.0
        %v846 = vsel %vm446, %v391, 0.0
        %v847 = vadd.f32 %v845, %v846
        %v848 = vrot.slane %v847, 4
        %v849 = vadd.f32 %v847, %v848
        %v850 = vrot.slane %v849, 2
        %v851 = vadd.f32 %v849, %v850
        %v852 = vrot.slane %v851, 1
        %v853 = vadd.f32 %v851, %v852
        %v854 = vsel %vm446, %v392, 0.0
        %v855 = vsel %vm446, %v393, 0.0
        %v856 = vadd.f32 %v854, %v855
        %v857 = vrot.slane %v856, 4
        %v858 = vadd.f32 %v856, %v857
        %v859 = vrot.slane %v858, 2
        %v860 = vadd.f32 %v858, %v859
        %v861 = vrot.slane %v860, 1
        %v862 = vadd.f32 %v860, %v861
        %v863 = vsel %vm446, %v394, 0.0
        %v864 = vsel %vm446, %v395, 0.0
        %v865 = vadd.f32 %v863, %v864
        %v866 = vrot.slane %v865, 4
        %v867 = vadd.f32 %v865, %v866
        %v868 = vrot.slane %v867, 2
        %v869 = vadd.f32 %v867, %v868
        %v870 = vrot.slane %v869, 1
        %v871 = vadd.f32 %v869, %v870
        %v872 = vsel %vm446, %v396, 0.0
        %v873 = vsel %vm446, %v397, 0.0
        %v874 = vadd.f32 %v872, %v873
        %v875 = vrot.slane %v874, 4
        %v876 = vadd.f32 %v874, %v875
        %v877 = vrot.slane %v876, 2
        %v878 = vadd.f32 %v876, %v877
        %v879 = vrot.slane %v878, 1
        %v880 = vadd.f32 %v878, %v879
        %v881 = vsel %vm446, %v398, 0.0
        %v882 = vsel %vm446, %v399, 0.0
        %v883 = vadd.f32 %v881, %v882
        %v884 = vrot.slane %v883, 4
        %v885 = vadd.f32 %v883, %v884
        %v886 = vrot.slane %v885, 2
        %v887 = vadd.f32 %v885, %v886
        %v888 = vrot.slane %v887, 1
        %v889 = vadd.f32 %v887, %v888
        %v890 = vsel %vm446, %v400, 0.0
        %v891 = vsel %vm446, %v401, 0.0
        %v892 = vadd.f32 %v890, %v891
        %v893 = vrot.slane %v892, 4
        %v894 = vadd.f32 %v892, %v893
        %v895 = vrot.slane %v894, 2
        %v896 = vadd.f32 %v894, %v895
        %v897 = vrot.slane %v896, 1
        %v898 = vadd.f32 %v896, %v897
        %v899 = vsel %vm446, %v402, 0.0
        %v900 = vsel %vm446, %v403, 0.0
        %v901 = vadd.f32 %v899, %v900
        %v902 = vrot.slane %v901, 4
        %v903 = vadd.f32 %v901, %v902
        %v904 = vrot.slane %v903, 2
        %v905 = vadd.f32 %v903, %v904
        %v906 = vrot.slane %v905, 1
        %v907 = vadd.f32 %v905, %v906
        %v908 = vsel %vm446, %v404, 0.0
        %v909 = vsel %vm446, %v405, 0.0
        %v910 = vadd.f32 %v908, %v909
        %v911 = vrot.slane %v910, 4
        %v912 = vadd.f32 %v910, %v911
        %v913 = vrot.slane %v912, 2
        %v914 = vadd.f32 %v912, %v913
        %v915 = vrot.slane %v914, 1
        %v916 = vadd.f32 %v914, %v915
        %v917 = vrcp.pop 16.0
        %v918 = vmul.f32 %v853, %v917
        %v919 = vmul.f32 %v862, %v917
        %v920 = vmul.f32 %v871, %v917
        %v921 = vmul.f32 %v880, %v917
        %v922 = vmul.f32 %v889, %v917
        %v923 = vmul.f32 %v898, %v917
        %v924 = vmul.f32 %v907, %v917
        %v925 = vmul.f32 %v916, %v917
        %vm934 = vcmask 1041409
        %v935 = vsel %vm934, %v790, %v781
        %vm936 = vcmask 1042434
        %v937 = vsel %vm936, %v799, %v935
        %vm938 = vcmask 1043459
        %v939 = vsel %vm938, %v808, %v937
        %vm940 = vcmask 1044484
        %v941 = vsel %vm940, %v817, %v939
        %vm942 = vcmask 1045509
        %v943 = vsel %vm942, %v826, %v941
        %vm944 = vcmask 1046534
        %v945 = vsel %vm944, %v835, %v943
        %vm946 = vcmask 1047559
        %v947 = vsel %vm946, %v844, %v945
        %v957 = vsel %vm934, %v919, %v918
        %v958 = vsel %vm936, %v920, %v957
        %v959 = vsel %vm938, %v921, %v958
        %v960 = vsel %vm940, %v922, %v959
        %v961 = vsel %vm942, %v923, %v960
        %v962 = vsel %vm944, %v924, %v961
        %v963 = vsel %vm946, %v925, %v962
        %964 = vrot.lane.b32.xlu0 %v963, 64
        %v965 = vpop.permute.xlu0 %964
        %v967 = vsel %vm446, %v947, %v965
        %v968 = vld [vmem:[%s2] sm:$0xff]
        %v969 = vld [vmem:[%s2 + $0x8] sm:$0xff]
        %v970 = vld [vmem:[%s2 + $0x10] sm:$0xff]
        %v971 = vld [vmem:[%s2 + $0x18] sm:$0xff]
        %v972 = vld [vmem:[%s2 + $0x20] sm:$0xff]
        %v973 = vld [vmem:[%s2 + $0x28] sm:$0xff]
        %v974 = vld [vmem:[%s2 + $0x30] sm:$0xff]
        %v975 = vld [vmem:[%s2 + $0x38] sm:$0xff]
        %v976 = vld [vmem:[%s2 + $0x40] sm:$0xff]
        %v977 = vld [vmem:[%s2 + $0x48] sm:$0xff]
        %v978 = vld [vmem:[%s2 + $0x50] sm:$0xff]
        %v979 = vld [vmem:[%s2 + $0x58] sm:$0xff]
        %v980 = vld [vmem:[%s2 + $0x60] sm:$0xff]
        %v981 = vld [vmem:[%s2 + $0x68] sm:$0xff]
        %v982 = vld [vmem:[%s2 + $0x70] sm:$0xff]
        %v983 = vld [vmem:[%s2 + $0x78] sm:$0xff]
        %s984 = sld [smem:[#allocation3]]
        %v985 = vstv %s984
        %986 = vmatprep.subr.mxu0 0.0
        %987 = vmatpush1.msra.mxu0 %v983
        %988 = vmatprep.subr.mxu0 0.0
        %989 = vmatpush1.msra.mxu0 %v982
        %990 = vmatprep.subr.mxu0 0.0
        %991 = vmatpush1.msra.mxu0 %v981
        %992 = vmatprep.subr.mxu0 0.0
        %993 = vmatpush1.msra.mxu0 %v980
        %994 = vmatprep.subr.mxu0 0.0
        %995 = vmatpush1.msra.mxu0 %v979
        %996 = vmatprep.subr.mxu0 0.0
        %997 = vmatpush1.msra.mxu0 %v978
        %998 = vmatprep.subr.mxu0 0.0
        %999 = vmatpush1.msra.mxu0 %v977
        %1000 = vmatprep.subr.mxu0 0.0
        %1001 = vmatpush1.msra.mxu0 %v976
        %1002 = vmatprep.subr.mxu0 0.0
        %1003 = vmatpush1.msra.mxu0 %v975
        %1004 = vmatprep.subr.mxu0 0.0
        %1005 = vmatpush1.msra.mxu0 %v974
        %1006 = vmatprep.subr.mxu0 0.0
        %1007 = vmatpush1.msra.mxu0 %v973
        %1008 = vmatprep.subr.mxu0 0.0
        %1009 = vmatpush1.msra.mxu0 %v972
        %1010 = vmatprep.subr.mxu0 0.0
        %1011 = vmatpush1.msra.mxu0 %v971
        %1012 = vmatprep.subr.mxu0 0.0
        %1013 = vmatpush1.msra.mxu0 %v970
        %1014 = vmatprep.subr.mxu0 0.0
        %1015 = vmatpush1.msra.mxu0 %v969
        %1016 = vmatprep.subr.mxu0 0.0
        %1017 = vmatpush1.msra.mxu0 %v968
        %1018 = vmatprep.subr.mxu0 0.0
        %1019 = vmatpush2.msra.mxu0 0.0
        %1020 = vmatprep.subr.mxu0 0.0
        %1021 = vmatpush2.msra.mxu0 0.0
        %1022 = vmatprep.subr.mxu0 0.0
        %1023 = vmatpush2.msra.mxu0 0.0
        %1024 = vmatprep.subr.mxu0 0.0
        %1025 = vmatpush2.msra.mxu0 0.0
        %1026 = vmatprep.subr.mxu0 0.0
        %1027 = vmatpush2.msra.mxu0 0.0
        %1028 = vmatprep.subr.mxu0 0.0
        %1029 = vmatpush2.msra.mxu0 0.0
        %1030 = vmatprep.subr.mxu0 0.0
        %1031 = vmatpush2.msra.mxu0 0.0
        %1032 = vmatprep.subr.mxu0 0.0
        %1033 = vmatpush2.msra.mxu0 0.0
        %1034 = vmatprep.subr.mxu0 0.0
        %1035 = vmatpush2.msra.mxu0 0.0
        %1036 = vmatprep.subr.mxu0 0.0
        %1037 = vmatpush2.msra.mxu0 0.0
        %1038 = vmatprep.subr.mxu0 0.0
        %1039 = vmatpush2.msra.mxu0 0.0
        %1040 = vmatprep.subr.mxu0 0.0
        %1041 = vmatpush2.msra.mxu0 0.0
        %1042 = vmatprep.subr.mxu0 0.0
        %1043 = vmatpush2.msra.mxu0 0.0
        %1044 = vmatprep.subr.mxu0 0.0
        %1045 = vmatpush2.msra.mxu0 0.0
        %1046 = vmatprep.subr.mxu0 0.0
        %1047 = vmatpush2.msra.mxu0 0.0
        %1048 = vmatprep.subr.mxu0 0.0
        %1049 = vmatpush2.msra.mxu0 0.0
        %1050 = vmatprep.mubr.f32.mxu0 0.0
        %1051 = vmatmul.mubr.f32.gmra.mxu0 %v967
        %v1052 = vpop.f32.mrf.mxu0
        %v1053 = vadd.f32 %v985, %v1052
        %v1054 = vpop.f32.mrf.mxu0
        %1055 = vdwg.mxu0
        %v1056 = vxor.u32 %v1053, 2147483648
        %v1057 = vmul.f32 %v1056, 1.442695
        %v1058 = vpow.pop %v1057
        %v1059 = vadd.f32 %v1058, 1.0
        %v1060 = vrcp.pop %v1059
        %v1061 = vmul.f32 1.0, %v1060
        %v1063 = vcombine.high %v1061, %v1061
        %v1065 = vunpack.c.l.s4 1966171168
        %v1066 = vunpack.c.0.s8 %v1065
        %v1067 = vlaneseq
        %v1068 = vshrl.u32 %v1067, 7
        %v1069 = vsub.s32 %v1066, %v1068
        %v1070 = vrot.slane %v1061, %v1069
        %v1072 = vunpack.c.l.s4 1966171168
        %v1073 = vunpack.c.0.s8 %v1072
        %v1074 = vlaneseq
        %v1075 = vshrl.u32 %v1074, 7
        %v1076 = vsub.s32 %v1073, %v1075
        %v1077 = vrot.slane %v1063, %v1076
        %v1078 = vcombine.high %v1070, %v1070
        %v1079 = vcombine.high %v1077, %v1077
        %v1081 = vunpack.c.l.s4 1966171168
        %v1082 = vunpack.c.0.s8 %v1081
        %v1083 = vlaneseq
        %v1084 = vshrl.u32 %v1083, 7
        %v1085 = vsub.s32 %v1082, %v1084
        %v1086 = vrot.slane %v1070, %v1085
        %v1088 = vunpack.c.l.s4 1966171168
        %v1089 = vunpack.c.0.s8 %v1088
        %v1090 = vlaneseq
        %v1091 = vshrl.u32 %v1090, 7
        %v1092 = vsub.s32 %v1089, %v1091
        %v1093 = vrot.slane %v1077, %v1092
        %v1095 = vunpack.c.l.s4 1966171168
        %v1096 = vunpack.c.0.s8 %v1095
        %v1097 = vlaneseq
        %v1098 = vshrl.u32 %v1097, 7
        %v1099 = vsub.s32 %v1096, %v1098
        %v1100 = vrot.slane %v1078, %v1099
        %v1102 = vunpack.c.l.s4 1966171168
        %v1103 = vunpack.c.0.s8 %v1102
        %v1104 = vlaneseq
        %v1105 = vshrl.u32 %v1104, 7
        %v1106 = vsub.s32 %v1103, %v1105
        %v1107 = vrot.slane %v1079, %v1106
        %v1108 = vcombine.high %v1086, %v1086
        %v1109 = vcombine.high %v1093, %v1093
        %v1110 = vcombine.high %v1100, %v1100
        %v1111 = vcombine.high %v1107, %v1107
        %v1112 = vlaneseq
        %v1113 = vshrl.u32 %v1112, 7
        %v1114 = vsub.s32 0, %v1113
        %v1115 = vrot.slane %v1086, %v1114
        %v1116 = vlaneseq
        %v1117 = vshrl.u32 %v1116, 7
        %v1118 = vsub.s32 0, %v1117
        %v1119 = vrot.slane %v1100, %v1118
        %v1120 = vlaneseq
        %v1121 = vshrl.u32 %v1120, 7
        %v1122 = vsub.s32 0, %v1121
        %v1123 = vrot.slane %v1108, %v1122
        %v1124 = vlaneseq
        %v1125 = vshrl.u32 %v1124, 7
        %v1126 = vsub.s32 0, %v1125
        %v1127 = vrot.slane %v1110, %v1126
        %v1128 = vlaneseq
        %v1129 = vshrl.u32 %v1128, 7
        %v1130 = vsub.s32 0, %v1129
        %v1131 = vrot.slane %v1093, %v1130
        %v1132 = vlaneseq
        %v1133 = vshrl.u32 %v1132, 7
        %v1134 = vsub.s32 0, %v1133
        %v1135 = vrot.slane %v1107, %v1134
        %v1136 = vlaneseq
        %v1137 = vshrl.u32 %v1136, 7
        %v1138 = vsub.s32 0, %v1137
        %v1139 = vrot.slane %v1109, %v1138
        %v1140 = vlaneseq
        %v1141 = vshrl.u32 %v1140, 7
        %v1142 = vsub.s32 0, %v1141
        %v1143 = vrot.slane %v1111, %v1142
        %v1152 = vmul.f32 %v390, %v1115
        %v1153 = vmul.f32 %v391, %v1115
        %v1154 = vmul.f32 %v392, %v1119
        %v1155 = vmul.f32 %v393, %v1119
        %v1156 = vmul.f32 %v394, %v1123
        %v1157 = vmul.f32 %v395, %v1123
        %v1158 = vmul.f32 %v396, %v1127
        %v1159 = vmul.f32 %v397, %v1127
        %v1160 = vmul.f32 %v398, %v1131
        %v1161 = vmul.f32 %v399, %v1131
        %v1162 = vmul.f32 %v400, %v1135
        %v1163 = vmul.f32 %v401, %v1135
        %v1164 = vmul.f32 %v402, %v1139
        %v1165 = vmul.f32 %v403, %v1139
        %v1166 = vmul.f32 %v404, %v1143
        %v1167 = vmul.f32 %v405, %v1143
        %v1168 = vadd.f32 %v757, %v1152
        %v1169 = vadd.f32 %v758, %v1153
        %v1170 = vadd.f32 %v759, %v1154
        %v1171 = vadd.f32 %v760, %v1155
        %v1172 = vadd.f32 %v761, %v1156
        %v1173 = vadd.f32 %v762, %v1157
        %v1174 = vadd.f32 %v763, %v1158
        %v1175 = vadd.f32 %v764, %v1159
        %v1176 = vadd.f32 %v765, %v1160
        %v1177 = vadd.f32 %v766, %v1161
        %v1178 = vadd.f32 %v767, %v1162
        %v1179 = vadd.f32 %v768, %v1163
        %v1180 = vadd.f32 %v769, %v1164
        %v1181 = vadd.f32 %v770, %v1165
        %v1182 = vadd.f32 %v771, %v1166
        %v1183 = vadd.f32 %v772, %v1167
        %v1184 = vsel %vm446, %v1168, 0.0
        %v1185 = vsel %vm446, %v1169, 0.0
        %v1186 = vadd.f32 %v1184, %v1185
        %v1187 = vrot.slane %v1186, 4
        %v1188 = vadd.f32 %v1186, %v1187
        %v1189 = vrot.slane %v1188, 2
        %v1190 = vadd.f32 %v1188, %v1189
        %v1191 = vrot.slane %v1190, 1
        %v1192 = vadd.f32 %v1190, %v1191
        %v1193 = vsel %vm446, %v1170, 0.0
        %v1194 = vsel %vm446, %v1171, 0.0
        %v1195 = vadd.f32 %v1193, %v1194
        %v1196 = vrot.slane %v1195, 4
        %v1197 = vadd.f32 %v1195, %v1196
        %v1198 = vrot.slane %v1197, 2
        %v1199 = vadd.f32 %v1197, %v1198
        %v1200 = vrot.slane %v1199, 1
        %v1201 = vadd.f32 %v1199, %v1200
        %v1202 = vsel %vm446, %v1172, 0.0
        %v1203 = vsel %vm446, %v1173, 0.0
        %v1204 = vadd.f32 %v1202, %v1203
        %v1205 = vrot.slane %v1204, 4
        %v1206 = vadd.f32 %v1204, %v1205
        %v1207 = vrot.slane %v1206, 2
        %v1208 = vadd.f32 %v1206, %v1207
        %v1209 = vrot.slane %v1208, 1
        %v1210 = vadd.f32 %v1208, %v1209
        %v1211 = vsel %vm446, %v1174, 0.0
        %v1212 = vsel %vm446, %v1175, 0.0
        %v1213 = vadd.f32 %v1211, %v1212
        %v1214 = vrot.slane %v1213, 4
        %v1215 = vadd.f32 %v1213, %v1214
        %v1216 = vrot.slane %v1215, 2
        %v1217 = vadd.f32 %v1215, %v1216
        %v1218 = vrot.slane %v1217, 1
        %v1219 = vadd.f32 %v1217, %v1218
        %v1220 = vsel %vm446, %v1176, 0.0
        %v1221 = vsel %vm446, %v1177, 0.0
        %v1222 = vadd.f32 %v1220, %v1221
        %v1223 = vrot.slane %v1222, 4
        %v1224 = vadd.f32 %v1222, %v1223
        %v1225 = vrot.slane %v1224, 2
        %v1226 = vadd.f32 %v1224, %v1225
        %v1227 = vrot.slane %v1226, 1
        %v1228 = vadd.f32 %v1226, %v1227
        %v1229 = vsel %vm446, %v1178, 0.0
        %v1230 = vsel %vm446, %v1179, 0.0
        %v1231 = vadd.f32 %v1229, %v1230
        %v1232 = vrot.slane %v1231, 4
        %v1233 = vadd.f32 %v1231, %v1232
        %v1234 = vrot.slane %v1233, 2
        %v1235 = vadd.f32 %v1233, %v1234
        %v1236 = vrot.slane %v1235, 1
        %v1237 = vadd.f32 %v1235, %v1236
        %v1238 = vsel %vm446, %v1180, 0.0
        %v1239 = vsel %vm446, %v1181, 0.0
        %v1240 = vadd.f32 %v1238, %v1239
        %v1241 = vrot.slane %v1240, 4
        %v1242 = vadd.f32 %v1240, %v1241
        %v1243 = vrot.slane %v1242, 2
        %v1244 = vadd.f32 %v1242, %v1243
        %v1245 = vrot.slane %v1244, 1
        %v1246 = vadd.f32 %v1244, %v1245
        %v1247 = vsel %vm446, %v1182, 0.0
        %v1248 = vsel %vm446, %v1183, 0.0
        %v1249 = vadd.f32 %v1247, %v1248
        %v1250 = vrot.slane %v1249, 4
        %v1251 = vadd.f32 %v1249, %v1250
        %v1252 = vrot.slane %v1251, 2
        %v1253 = vadd.f32 %v1251, %v1252
        %v1254 = vrot.slane %v1253, 1
        %v1255 = vadd.f32 %v1253, %v1254
        %v1256 = vmul.f32 %v1192, %v917
        %v1257 = vmul.f32 %v1201, %v917
        %v1258 = vmul.f32 %v1210, %v917
        %v1259 = vmul.f32 %v1219, %v917
        %v1260 = vmul.f32 %v1228, %v917
        %v1261 = vmul.f32 %v1237, %v917
        %v1262 = vmul.f32 %v1246, %v917
        %v1263 = vmul.f32 %v1255, %v917
        %v1264 = vsub.f32 %v1168, %v1256
        %v1265 = vsub.f32 %v1169, %v1256
        %v1266 = vsub.f32 %v1170, %v1257
        %v1267 = vsub.f32 %v1171, %v1257
        %v1268 = vsub.f32 %v1172, %v1258
        %v1269 = vsub.f32 %v1173, %v1258
        %v1270 = vsub.f32 %v1174, %v1259
        %v1271 = vsub.f32 %v1175, %v1259
        %v1272 = vsub.f32 %v1176, %v1260
        %v1273 = vsub.f32 %v1177, %v1260
        %v1274 = vsub.f32 %v1178, %v1261
        %v1275 = vsub.f32 %v1179, %v1261
        %v1276 = vsub.f32 %v1180, %v1262
        %v1277 = vsub.f32 %v1181, %v1262
        %v1278 = vsub.f32 %v1182, %v1263
        %v1279 = vsub.f32 %v1183, %v1263
        %v1280 = vmul.f32 %v1264, %v1264
        %v1281 = vmul.f32 %v1265, %v1265
        %v1282 = vmul.f32 %v1266, %v1266
        %v1283 = vmul.f32 %v1267, %v1267
        %v1284 = vmul.f32 %v1268, %v1268
        %v1285 = vmul.f32 %v1269, %v1269
        %v1286 = vmul.f32 %v1270, %v1270
        %v1287 = vmul.f32 %v1271, %v1271
        %v1288 = vmul.f32 %v1272, %v1272
        %v1289 = vmul.f32 %v1273, %v1273
        %v1290 = vmul.f32 %v1274, %v1274
        %v1291 = vmul.f32 %v1275, %v1275
        %v1292 = vmul.f32 %v1276, %v1276
        %v1293 = vmul.f32 %v1277, %v1277
        %v1294 = vmul.f32 %v1278, %v1278
        %v1295 = vmul.f32 %v1279, %v1279
        %v1296 = vsel %vm446, %v1280, 0.0
        %v1297 = vsel %vm446, %v1281, 0.0
        %v1298 = vadd.f32 %v1296, %v1297
        %v1299 = vrot.slane %v1298, 4
        %v1300 = vadd.f32 %v1298, %v1299
        %v1301 = vrot.slane %v1300, 2
        %v1302 = vadd.f32 %v1300, %v1301
        %v1303 = vrot.slane %v1302, 1
        %v1304 = vadd.f32 %v1302, %v1303
        %v1305 = vsel %vm446, %v1282, 0.0
        %v1306 = vsel %vm446, %v1283, 0.0
        %v1307 = vadd.f32 %v1305, %v1306
        %v1308 = vrot.slane %v1307, 4
        %v1309 = vadd.f32 %v1307, %v1308
        %v1310 = vrot.slane %v1309, 2
        %v1311 = vadd.f32 %v1309, %v1310
        %v1312 = vrot.slane %v1311, 1
        %v1313 = vadd.f32 %v1311, %v1312
        %v1314 = vsel %vm446, %v1284, 0.0
        %v1315 = vsel %vm446, %v1285, 0.0
        %v1316 = vadd.f32 %v1314, %v1315
        %v1317 = vrot.slane %v1316, 4
        %v1318 = vadd.f32 %v1316, %v1317
        %v1319 = vrot.slane %v1318, 2
        %v1320 = vadd.f32 %v1318, %v1319
        %v1321 = vrot.slane %v1320, 1
        %v1322 = vadd.f32 %v1320, %v1321
        %v1323 = vsel %vm446, %v1286, 0.0
        %v1324 = vsel %vm446, %v1287, 0.0
        %v1325 = vadd.f32 %v1323, %v1324
        %v1326 = vrot.slane %v1325, 4
        %v1327 = vadd.f32 %v1325, %v1326
        %v1328 = vrot.slane %v1327, 2
        %v1329 = vadd.f32 %v1327, %v1328
        %v1330 = vrot.slane %v1329, 1
        %v1331 = vadd.f32 %v1329, %v1330
        %v1332 = vsel %vm446, %v1288, 0.0
        %v1333 = vsel %vm446, %v1289, 0.0
        %v1334 = vadd.f32 %v1332, %v1333
        %v1335 = vrot.slane %v1334, 4
        %v1336 = vadd.f32 %v1334, %v1335
        %v1337 = vrot.slane %v1336, 2
        %v1338 = vadd.f32 %v1336, %v1337
        %v1339 = vrot.slane %v1338, 1
        %v1340 = vadd.f32 %v1338, %v1339
        %v1341 = vsel %vm446, %v1290, 0.0
        %v1342 = vsel %vm446, %v1291, 0.0
        %v1343 = vadd.f32 %v1341, %v1342
        %v1344 = vrot.slane %v1343, 4
        %v1345 = vadd.f32 %v1343, %v1344
        %v1346 = vrot.slane %v1345, 2
        %v1347 = vadd.f32 %v1345, %v1346
        %v1348 = vrot.slane %v1347, 1
        %v1349 = vadd.f32 %v1347, %v1348
        %v1350 = vsel %vm446, %v1292, 0.0
        %v1351 = vsel %vm446, %v1293, 0.0
        %v1352 = vadd.f32 %v1350, %v1351
        %v1353 = vrot.slane %v1352, 4
        %v1354 = vadd.f32 %v1352, %v1353
        %v1355 = vrot.slane %v1354, 2
        %v1356 = vadd.f32 %v1354, %v1355
        %v1357 = vrot.slane %v1356, 1
        %v1358 = vadd.f32 %v1356, %v1357
        %v1359 = vsel %vm446, %v1294, 0.0
        %v1360 = vsel %vm446, %v1295, 0.0
        %v1361 = vadd.f32 %v1359, %v1360
        %v1362 = vrot.slane %v1361, 4
        %v1363 = vadd.f32 %v1361, %v1362
        %v1364 = vrot.slane %v1363, 2
        %v1365 = vadd.f32 %v1363, %v1364
        %v1366 = vrot.slane %v1365, 1
        %v1367 = vadd.f32 %v1365, %v1366
        %v1368 = vmul.f32 %v1304, %v917
        %v1369 = vmul.f32 %v1313, %v917
        %v1370 = vmul.f32 %v1322, %v917
        %v1371 = vmul.f32 %v1331, %v917
        %v1372 = vmul.f32 %v1340, %v917
        %v1373 = vmul.f32 %v1349, %v917
        %v1374 = vmul.f32 %v1358, %v917
        %v1375 = vmul.f32 %v1367, %v917
        %v1376 = vadd.f32 %v1368, 1e-05
        %v1377 = vadd.f32 %v1369, 1e-05
        %v1378 = vadd.f32 %v1370, 1e-05
        %v1379 = vadd.f32 %v1371, 1e-05
        %v1380 = vadd.f32 %v1372, 1e-05
        %v1381 = vadd.f32 %v1373, 1e-05
        %v1382 = vadd.f32 %v1374, 1e-05
        %v1383 = vadd.f32 %v1375, 1e-05
        %v1384 = vrsqrt.pop %v1376
        %v1385 = vrsqrt.pop %v1377
        %v1386 = vrsqrt.pop %v1378
        %v1387 = vrsqrt.pop %v1379
        %v1388 = vrsqrt.pop %v1380
        %v1389 = vrsqrt.pop %v1381
        %v1390 = vrsqrt.pop %v1382
        %v1391 = vrsqrt.pop %v1383
        %v1392 = vmul.f32 %v1264, %v1384
        %v1393 = vmul.f32 %v1265, %v1384
        %v1394 = vmul.f32 %v1266, %v1385
        %v1395 = vmul.f32 %v1267, %v1385
        %v1396 = vmul.f32 %v1268, %v1386
        %v1397 = vmul.f32 %v1269, %v1386
        %v1398 = vmul.f32 %v1270, %v1387
        %v1399 = vmul.f32 %v1271, %v1387
        %v1400 = vmul.f32 %v1272, %v1388
        %v1401 = vmul.f32 %v1273, %v1388
        %v1402 = vmul.f32 %v1274, %v1389
        %v1403 = vmul.f32 %v1275, %v1389
        %v1404 = vmul.f32 %v1276, %v1390
        %v1405 = vmul.f32 %v1277, %v1390
        %v1406 = vmul.f32 %v1278, %v1391
        %v1407 = vmul.f32 %v1279, %v1391
        %v1408 = vld [vmem:[%s4] sm:$0xff]
        %v1409 = vld [vmem:[%s4 + $0x8] sm:$0xff]
        %1411 = vset.pattern.permute.xlu0 0
        %1412 = vperm.xlu0 %1411, %v1408
        %v1413 = vpop.permute.xlu0 %1412
        %1416 = vset.pattern.permute.xlu0 0
        %1417 = vperm.xlu0 %1416, %v1409
        %v1418 = vpop.permute.xlu0 %1417
        %v1420 = vmul.f32 %v1392, %v1413
        %v1421 = vmul.f32 %v1393, %v1418
        %v1422 = vmul.f32 %v1394, %v1413
        %v1423 = vmul.f32 %v1395, %v1418
        %v1424 = vmul.f32 %v1396, %v1413
        %v1425 = vmul.f32 %v1397, %v1418
        %v1426 = vmul.f32 %v1398, %v1413
        %v1427 = vmul.f32 %v1399, %v1418
        %v1428 = vmul.f32 %v1400, %v1413
        %v1429 = vmul.f32 %v1401, %v1418
        %v1430 = vmul.f32 %v1402, %v1413
        %v1431 = vmul.f32 %v1403, %v1418
        %v1432 = vmul.f32 %v1404, %v1413
        %v1433 = vmul.f32 %v1405, %v1418
        %v1434 = vmul.f32 %v1406, %v1413
        %v1435 = vmul.f32 %v1407, %v1418
        %v1436 = vld [vmem:[%s5] sm:$0xff]
        %v1437 = vld [vmem:[%s5 + $0x8] sm:$0xff]
        %1439 = vset.pattern.permute.xlu0 0
        %1440 = vperm.xlu0 %1439, %v1436
        %v1441 = vpop.permute.xlu0 %1440
        %1444 = vset.pattern.permute.xlu0 0
        %1445 = vperm.xlu0 %1444, %v1437
        %v1446 = vpop.permute.xlu0 %1445
        %v1448 = vadd.f32 %v1420, %v1441
        %v1449 = vadd.f32 %v1421, %v1446
        %v1450 = vadd.f32 %v1422, %v1441
        %v1451 = vadd.f32 %v1423, %v1446
        %v1452 = vadd.f32 %v1424, %v1441
        %v1453 = vadd.f32 %v1425, %v1446
        %v1454 = vadd.f32 %v1426, %v1441
        %v1455 = vadd.f32 %v1427, %v1446
        %v1456 = vadd.f32 %v1428, %v1441
        %v1457 = vadd.f32 %v1429, %v1446
        %v1458 = vadd.f32 %v1430, %v1441
        %v1459 = vadd.f32 %v1431, %v1446
        %v1460 = vadd.f32 %v1432, %v1441
        %v1461 = vadd.f32 %v1433, %v1446
        %v1462 = vadd.f32 %v1434, %v1441
        %v1463 = vadd.f32 %v1435, %v1446
        %v1464 = vld [vmem:[%s6] sm:$0xff]
        %v1465 = vld [vmem:[%s6 + $0x8] sm:$0xff]
        %v1466 = vld [vmem:[%s6 + $0x10] sm:$0xff]
        %v1467 = vld [vmem:[%s6 + $0x18] sm:$0xff]
        %v1468 = vld [vmem:[%s6 + $0x20] sm:$0xff]
        %v1469 = vld [vmem:[%s6 + $0x28] sm:$0xff]
        %v1470 = vld [vmem:[%s6 + $0x30] sm:$0xff]
        %v1471 = vld [vmem:[%s6 + $0x38] sm:$0xff]
        %v1472 = vld [vmem:[%s7] sm:$0x1]
        %v1474 = vlaneseq
        %v1475 = vshrl.u32 %v1474, 7
        %v1476 = vsub.s32 0, %v1475
        %v1477 = vrot.slane %v1472, %v1476
        %v1480 = vsel %vm446, %v1448, 0
        %v1483 = vsel %vm446, %v1449, 0
        %v1486 = vsel %vm446, %v1450, 0
        %v1489 = vsel %vm446, %v1451, 0
        %v1492 = vsel %vm446, %v1452, 0
        %v1495 = vsel %vm446, %v1453, 0
        %v1498 = vsel %vm446, %v1454, 0
        %v1501 = vsel %vm446, %v1455, 0
        %v1504 = vsel %vm446, %v1456, 0
        %v1507 = vsel %vm446, %v1457, 0
        %v1510 = vsel %vm446, %v1458, 0
        %v1513 = vsel %vm446, %v1459, 0
        %v1516 = vsel %vm446, %v1460, 0
        %v1519 = vsel %vm446, %v1461, 0
        %v1522 = vsel %vm446, %v1462, 0
        %v1525 = vsel %vm446, %v1463, 0
        %1527 = vmatprep.subr.mxu0 0.0
        %1528 = vmatpush1.msra.mxu0 0.0
        %1529 = vmatprep.subr.mxu0 0.0
        %1530 = vmatpush1.msra.mxu0 0.0
        %1531 = vmatprep.subr.mxu0 0.0
        %1532 = vmatpush1.msra.mxu0 0.0
        %1533 = vmatprep.subr.mxu0 0.0
        %1534 = vmatpush1.msra.mxu0 0.0
        %1535 = vmatprep.subr.mxu0 0.0
        %1536 = vmatpush1.msra.mxu0 0.0
        %1537 = vmatprep.subr.mxu0 0.0
        %1538 = vmatpush1.msra.mxu0 0.0
        %1539 = vmatprep.subr.mxu0 0.0
        %1540 = vmatpush1.msra.mxu0 0.0
        %1541 = vmatprep.subr.mxu0 0.0
        %1542 = vmatpush1.msra.mxu0 0.0
        %1543 = vmatprep.subr.mxu0 0.0
        %1544 = vmatpush1.msra.mxu0 %v1471
        %1545 = vmatprep.subr.mxu0 0.0
        %1546 = vmatpush1.msra.mxu0 %v1470
        %1547 = vmatprep.subr.mxu0 0.0
        %1548 = vmatpush1.msra.mxu0 %v1469
        %1549 = vmatprep.subr.mxu0 0.0
        %1550 = vmatpush1.msra.mxu0 %v1468
        %1551 = vmatprep.subr.mxu0 0.0
        %1552 = vmatpush1.msra.mxu0 %v1467
        %1553 = vmatprep.subr.mxu0 0.0
        %1554 = vmatpush1.msra.mxu0 %v1466
        %1555 = vmatprep.subr.mxu0 0.0
        %1556 = vmatpush1.msra.mxu0 %v1465
        %1557 = vmatprep.subr.mxu0 0.0
        %1558 = vmatpush1.msra.mxu0 %v1464
        %1559 = vmatprep.subr.mxu0 0.0
        %1560 = vmatpush2.msra.mxu0 0.0
        %1561 = vmatprep.subr.mxu0 0.0
        %1562 = vmatpush2.msra.mxu0 0.0
        %1563 = vmatprep.subr.mxu0 0.0
        %1564 = vmatpush2.msra.mxu0 0.0
        %1565 = vmatprep.subr.mxu0 0.0
        %1566 = vmatpush2.msra.mxu0 0.0
        %1567 = vmatprep.subr.mxu0 0.0
        %1568 = vmatpush2.msra.mxu0 0.0
        %1569 = vmatprep.subr.mxu0 0.0
        %1570 = vmatpush2.msra.mxu0 0.0
        %1571 = vmatprep.subr.mxu0 0.0
        %1572 = vmatpush2.msra.mxu0 0.0
        %1573 = vmatprep.subr.mxu0 0.0
        %1574 = vmatpush2.msra.mxu0 0.0
        %1575 = vmatprep.subr.mxu0 0.0
        %1576 = vmatpush2.msra.mxu0 0.0
        %1577 = vmatprep.subr.mxu0 0.0
        %1578 = vmatpush2.msra.mxu0 0.0
        %1579 = vmatprep.subr.mxu0 0.0
        %1580 = vmatpush2.msra.mxu0 0.0
        %1581 = vmatprep.subr.mxu0 0.0
        %1582 = vmatpush2.msra.mxu0 0.0
        %1583 = vmatprep.subr.mxu0 0.0
        %1584 = vmatpush2.msra.mxu0 0.0
        %1585 = vmatprep.subr.mxu0 0.0
        %1586 = vmatpush2.msra.mxu0 0.0
        %1587 = vmatprep.subr.mxu0 0.0
        %1588 = vmatpush2.msra.mxu0 0.0
        %1589 = vmatprep.subr.mxu0 0.0
        %1590 = vmatpush2.msra.mxu0 0.0
        %1591 = vmatprep.mubr.f32.mxu0 0.0
        %1592 = vmatmul.mubr.f32.gmra.mxu0 %v1480
        %v1593 = vpop.f32.mrf.mxu0
        %v1594 = vadd.f32 %v1477, %v1593
        %v1595 = vpop.f32.mrf.mxu0
        %1596 = vmatprep.mubr.f32.mxu0 0.0
        %1597 = vmatmul.mubr.f32.gmra.mxu0 %v1483
        %v1598 = vpop.f32.mrf.mxu0
        %v1599 = vadd.f32 %v1477, %v1598
        %v1600 = vpop.f32.mrf.mxu0
        %1601 = vmatprep.mubr.f32.mxu0 0.0
        %1602 = vmatmul.mubr.f32.gmra.mxu0 %v1486
        %v1603 = vpop.f32.mrf.mxu0
        %v1604 = vadd.f32 %v1477, %v1603
        %v1605 = vpop.f32.mrf.mxu0
        %1606 = vmatprep.mubr.f32.mxu0 0.0
        %1607 = vmatmul.mubr.f32.gmra.mxu0 %v1489
        %v1608 = vpop.f32.mrf.mxu0
        %v1609 = vadd.f32 %v1477, %v1608
        %v1610 = vpop.f32.mrf.mxu0
        %1611 = vmatprep.mubr.f32.mxu0 0.0
        %1612 = vmatmul.mubr.f32.gmra.mxu0 %v1492
        %v1613 = vpop.f32.mrf.mxu0
        %v1614 = vadd.f32 %v1477, %v1613
        %v1615 = vpop.f32.mrf.mxu0
        %1616 = vmatprep.mubr.f32.mxu0 0.0
        %1617 = vmatmul.mubr.f32.gmra.mxu0 %v1495
        %v1618 = vpop.f32.mrf.mxu0
        %v1619 = vadd.f32 %v1477, %v1618
        %v1620 = vpop.f32.mrf.mxu0
        %1621 = vmatprep.mubr.f32.mxu0 0.0
        %1622 = vmatmul.mubr.f32.gmra.mxu0 %v1498
        %v1623 = vpop.f32.mrf.mxu0
        %v1624 = vadd.f32 %v1477, %v1623
        %v1625 = vpop.f32.mrf.mxu0
        %1626 = vmatprep.mubr.f32.mxu0 0.0
        %1627 = vmatmul.mubr.f32.gmra.mxu0 %v1501
        %v1628 = vpop.f32.mrf.mxu0
        %v1629 = vadd.f32 %v1477, %v1628
        %v1630 = vpop.f32.mrf.mxu0
        %1631 = vmatprep.mubr.f32.mxu0 0.0
        %1632 = vmatmul.mubr.f32.gmra.mxu0 %v1504
        %v1633 = vpop.f32.mrf.mxu0
        %v1634 = vadd.f32 %v1477, %v1633
        %v1635 = vpop.f32.mrf.mxu0
        %1636 = vmatprep.mubr.f32.mxu0 0.0
        %1637 = vmatmul.mubr.f32.gmra.mxu0 %v1507
        %v1638 = vpop.f32.mrf.mxu0
        %v1639 = vadd.f32 %v1477, %v1638
        %v1640 = vpop.f32.mrf.mxu0
        %1641 = vmatprep.mubr.f32.mxu0 0.0
        %1642 = vmatmul.mubr.f32.gmra.mxu0 %v1510
        %v1643 = vpop.f32.mrf.mxu0
        %v1644 = vadd.f32 %v1477, %v1643
        %v1645 = vpop.f32.mrf.mxu0
        %1646 = vmatprep.mubr.f32.mxu0 0.0
        %1647 = vmatmul.mubr.f32.gmra.mxu0 %v1513
        %v1648 = vpop.f32.mrf.mxu0
        %v1649 = vadd.f32 %v1477, %v1648
        %v1650 = vpop.f32.mrf.mxu0
        %1651 = vmatprep.mubr.f32.mxu0 0.0
        %1652 = vmatmul.mubr.f32.gmra.mxu0 %v1516
        %v1653 = vpop.f32.mrf.mxu0
        %v1654 = vadd.f32 %v1477, %v1653
        %v1655 = vpop.f32.mrf.mxu0
        %1656 = vmatprep.mubr.f32.mxu0 0.0
        %1657 = vmatmul.mubr.f32.gmra.mxu0 %v1519
        %v1658 = vpop.f32.mrf.mxu0
        %v1659 = vadd.f32 %v1477, %v1658
        %v1660 = vpop.f32.mrf.mxu0
        %1661 = vmatprep.mubr.f32.mxu0 0.0
        %1662 = vmatmul.mubr.f32.gmra.mxu0 %v1522
        %v1663 = vpop.f32.mrf.mxu0
        %v1664 = vadd.f32 %v1477, %v1663
        %v1665 = vpop.f32.mrf.mxu0
        %1666 = vmatprep.mubr.f32.mxu0 0.0
        %1667 = vmatmul.mubr.f32.gmra.mxu0 %v1525
        %v1668 = vpop.f32.mrf.mxu0
        %v1669 = vadd.f32 %v1477, %v1668
        %v1670 = vpop.f32.mrf.mxu0
        %1671 = vdwg.mxu0
        %v1672 = vmul.f32 %v1594, 0.5
        %v1673 = vmul.f32 %v1599, 0.5
        %v1674 = vmul.f32 %v1604, 0.5
        %v1675 = vmul.f32 %v1609, 0.5
        %v1676 = vmul.f32 %v1614, 0.5
        %v1677 = vmul.f32 %v1619, 0.5
        %v1678 = vmul.f32 %v1624, 0.5
        %v1679 = vmul.f32 %v1629, 0.5
        %v1680 = vmul.f32 %v1634, 0.5
        %v1681 = vmul.f32 %v1639, 0.5
        %v1682 = vmul.f32 %v1644, 0.5
        %v1683 = vmul.f32 %v1649, 0.5
        %v1684 = vmul.f32 %v1654, 0.5
        %v1685 = vmul.f32 %v1659, 0.5
        %v1686 = vmul.f32 %v1664, 0.5
        %v1687 = vmul.f32 %v1669, 0.5
        %v1688 = vmul.f32 %v1594, 0.70710677
        %v1689 = vmul.f32 %v1599, 0.70710677
        %v1690 = vmul.f32 %v1604, 0.70710677
        %v1691 = vmul.f32 %v1609, 0.70710677
        %v1692 = vmul.f32 %v1614, 0.70710677
        %v1693 = vmul.f32 %v1619, 0.70710677
        %v1694 = vmul.f32 %v1624, 0.70710677
        %v1695 = vmul.f32 %v1629, 0.70710677
        %v1696 = vmul.f32 %v1634, 0.70710677
        %v1697 = vmul.f32 %v1639, 0.70710677
        %v1698 = vmul.f32 %v1644, 0.70710677
        %v1699 = vmul.f32 %v1649, 0.70710677
        %v1700 = vmul.f32 %v1654, 0.70710677
        %v1701 = vmul.f32 %v1659, 0.70710677
        %v1702 = vmul.f32 %v1664, 0.70710677
        %v1703 = vmul.f32 %v1669, 0.70710677
        %v1704 = verf.f32.pop %v1688
        %v1705 = verf.f32.pop %v1689
        %v1706 = verf.f32.pop %v1690
        %v1707 = verf.f32.pop %v1691
        %v1708 = verf.f32.pop %v1692
        %v1709 = verf.f32.pop %v1693
        %v1710 = verf.f32.pop %v1694
        %v1711 = verf.f32.pop %v1695
        %v1712 = verf.f32.pop %v1696
        %v1713 = verf.f32.pop %v1697
        %v1714 = verf.f32.pop %v1698
        %v1715 = verf.f32.pop %v1699
        %v1716 = verf.f32.pop %v1700
        %v1717 = verf.f32.pop %v1701
        %v1718 = verf.f32.pop %v1702
        %v1719 = verf.f32.pop %v1703
        %v1720 = vadd.f32 %v1704, 1.0
        %v1721 = vadd.f32 %v1705, 1.0
        %v1722 = vadd.f32 %v1706, 1.0
        %v1723 = vadd.f32 %v1707, 1.0
        %v1724 = vadd.f32 %v1708, 1.0
        %v1725 = vadd.f32 %v1709, 1.0
        %v1726 = vadd.f32 %v1710, 1.0
        %v1727 = vadd.f32 %v1711, 1.0
        %v1728 = vadd.f32 %v1712, 1.0
        %v1729 = vadd.f32 %v1713, 1.0
        %v1730 = vadd.f32 %v1714, 1.0
        %v1731 = vadd.f32 %v1715, 1.0
        %v1732 = vadd.f32 %v1716, 1.0
        %v1733 = vadd.f32 %v1717, 1.0
        %v1734 = vadd.f32 %v1718, 1.0
        %v1735 = vadd.f32 %v1719, 1.0
        %v1736 = vmul.f32 %v1672, %v1720
        %v1737 = vmul.f32 %v1673, %v1721
        %v1738 = vmul.f32 %v1674, %v1722
        %v1739 = vmul.f32 %v1675, %v1723
        %v1740 = vmul.f32 %v1676, %v1724
        %v1741 = vmul.f32 %v1677, %v1725
        %v1742 = vmul.f32 %v1678, %v1726
        %v1743 = vmul.f32 %v1679, %v1727
        %v1744 = vmul.f32 %v1680, %v1728
        %v1745 = vmul.f32 %v1681, %v1729
        %v1746 = vmul.f32 %v1682, %v1730
        %v1747 = vmul.f32 %v1683, %v1731
        %v1748 = vmul.f32 %v1684, %v1732
        %v1749 = vmul.f32 %v1685, %v1733
        %v1750 = vmul.f32 %v1686, %v1734
        %v1751 = vmul.f32 %v1687, %v1735
        %v1752 = vld [vmem:[%s8] sm:$0xff]
        %v1753 = vld [vmem:[%s8 + $0x8] sm:$0xff]
        %v1754 = vld [vmem:[%s8 + $0x10] sm:$0xff]
        %v1755 = vld [vmem:[%s8 + $0x18] sm:$0xff]
        %v1756 = vld [vmem:[%s8 + $0x20] sm:$0xff]
        %v1757 = vld [vmem:[%s8 + $0x28] sm:$0xff]
        %v1758 = vld [vmem:[%s8 + $0x30] sm:$0xff]
        %v1759 = vld [vmem:[%s8 + $0x38] sm:$0xff]
        %v1760 = vld [vmem:[%s8 + $0x40] sm:$0xff]
        %v1761 = vld [vmem:[%s8 + $0x48] sm:$0xff]
        %v1762 = vld [vmem:[%s8 + $0x50] sm:$0xff]
        %v1763 = vld [vmem:[%s8 + $0x58] sm:$0xff]
        %v1764 = vld [vmem:[%s8 + $0x60] sm:$0xff]
        %v1765 = vld [vmem:[%s8 + $0x68] sm:$0xff]
        %v1766 = vld [vmem:[%s8 + $0x70] sm:$0xff]
        %v1767 = vld [vmem:[%s8 + $0x78] sm:$0xff]
        %v1768 = vld [vmem:[%s9] sm:$0x1]
        %v1770 = vlaneseq
        %v1771 = vshrl.u32 %v1770, 7
        %v1772 = vsub.s32 0, %v1771
        %v1773 = vrot.slane %v1768, %v1772
        %1775 = vmatprep.subr.mxu0 0.0
        %1776 = vmatpush1.msra.mxu0 %v1767
        %1777 = vmatprep.subr.mxu0 0.0
        %1778 = vmatpush1.msra.mxu0 %v1766
        %1779 = vmatprep.subr.mxu0 0.0
        %1780 = vmatpush1.msra.mxu0 %v1765
        %1781 = vmatprep.subr.mxu0 0.0
        %1782 = vmatpush1.msra.mxu0 %v1764
        %1783 = vmatprep.subr.mxu0 0.0
        %1784 = vmatpush1.msra.mxu0 %v1763
        %1785 = vmatprep.subr.mxu0 0.0
        %1786 = vmatpush1.msra.mxu0 %v1762
        %1787 = vmatprep.subr.mxu0 0.0
        %1788 = vmatpush1.msra.mxu0 %v1761
        %1789 = vmatprep.subr.mxu0 0.0
        %1790 = vmatpush1.msra.mxu0 %v1760
        %1791 = vmatprep.subr.mxu0 0.0
        %1792 = vmatpush1.msra.mxu0 %v1759
        %1793 = vmatprep.subr.mxu0 0.0
        %1794 = vmatpush1.msra.mxu0 %v1758
        %1795 = vmatprep.subr.mxu0 0.0
        %1796 = vmatpush1.msra.mxu0 %v1757
        %1797 = vmatprep.subr.mxu0 0.0
        %1798 = vmatpush1.msra.mxu0 %v1756
        %1799 = vmatprep.subr.mxu0 0.0
        %1800 = vmatpush1.msra.mxu0 %v1755
        %1801 = vmatprep.subr.mxu0 0.0
        %1802 = vmatpush1.msra.mxu0 %v1754
        %1803 = vmatprep.subr.mxu0 0.0
        %1804 = vmatpush1.msra.mxu0 %v1753
        %1805 = vmatprep.subr.mxu0 0.0
        %1806 = vmatpush1.msra.mxu0 %v1752
        %1807 = vmatprep.subr.mxu0 0.0
        %1808 = vmatpush2.msra.mxu0 0.0
        %1809 = vmatprep.subr.mxu0 0.0
        %1810 = vmatpush2.msra.mxu0 0.0
        %1811 = vmatprep.subr.mxu0 0.0
        %1812 = vmatpush2.msra.mxu0 0.0
        %1813 = vmatprep.subr.mxu0 0.0
        %1814 = vmatpush2.msra.mxu0 0.0
        %1815 = vmatprep.subr.mxu0 0.0
        %1816 = vmatpush2.msra.mxu0 0.0
        %1817 = vmatprep.subr.mxu0 0.0
        %1818 = vmatpush2.msra.mxu0 0.0
        %1819 = vmatprep.subr.mxu0 0.0
        %1820 = vmatpush2.msra.mxu0 0.0
        %1821 = vmatprep.subr.mxu0 0.0
        %1822 = vmatpush2.msra.mxu0 0.0
        %1823 = vmatprep.subr.mxu0 0.0
        %1824 = vmatpush2.msra.mxu0 0.0
        %1825 = vmatprep.subr.mxu0 0.0
        %1826 = vmatpush2.msra.mxu0 0.0
        %1827 = vmatprep.subr.mxu0 0.0
        %1828 = vmatpush2.msra.mxu0 0.0
        %1829 = vmatprep.subr.mxu0 0.0
        %1830 = vmatpush2.msra.mxu0 0.0
        %1831 = vmatprep.subr.mxu0 0.0
        %1832 = vmatpush2.msra.mxu0 0.0
        %1833 = vmatprep.subr.mxu0 0.0
        %1834 = vmatpush2.msra.mxu0 0.0
        %1835 = vmatprep.subr.mxu0 0.0
        %1836 = vmatpush2.msra.mxu0 0.0
        %1837 = vmatprep.subr.mxu0 0.0
        %1838 = vmatpush2.msra.mxu0 0.0
        %1839 = vmatprep.mubr.f32.mxu0 0.0
        %1840 = vmatmul.mubr.f32.gmra.mxu0 %v1736
        %v1841 = vpop.f32.mrf.mxu0
        %v1842 = vadd.f32 %v1773, %v1841
        %v1843 = vpop.f32.mrf.mxu0
        %1844 = vmatprep.mubr.f32.mxu0 0.0
        %1845 = vmatmul.mubr.f32.gmra.mxu0 %v1737
        %v1846 = vpop.f32.mrf.mxu0
        %v1847 = vadd.f32 %v1773, %v1846
        %v1848 = vpop.f32.mrf.mxu0
        %1849 = vmatprep.mubr.f32.mxu0 0.0
        %1850 = vmatmul.mubr.f32.gmra.mxu0 %v1738
        %v1851 = vpop.f32.mrf.mxu0
        %v1852 = vadd.f32 %v1773, %v1851
        %v1853 = vpop.f32.mrf.mxu0
        %1854 = vmatprep.mubr.f32.mxu0 0.0
        %1855 = vmatmul.mubr.f32.gmra.mxu0 %v1739
        %v1856 = vpop.f32.mrf.mxu0
        %v1857 = vadd.f32 %v1773, %v1856
        %v1858 = vpop.f32.mrf.mxu0
        %1859 = vmatprep.mubr.f32.mxu0 0.0
        %1860 = vmatmul.mubr.f32.gmra.mxu0 %v1740
        %v1861 = vpop.f32.mrf.mxu0
        %v1862 = vadd.f32 %v1773, %v1861
        %v1863 = vpop.f32.mrf.mxu0
        %1864 = vmatprep.mubr.f32.mxu0 0.0
        %1865 = vmatmul.mubr.f32.gmra.mxu0 %v1741
        %v1866 = vpop.f32.mrf.mxu0
        %v1867 = vadd.f32 %v1773, %v1866
        %v1868 = vpop.f32.mrf.mxu0
        %1869 = vmatprep.mubr.f32.mxu0 0.0
        %1870 = vmatmul.mubr.f32.gmra.mxu0 %v1742
        %v1871 = vpop.f32.mrf.mxu0
        %v1872 = vadd.f32 %v1773, %v1871
        %v1873 = vpop.f32.mrf.mxu0
        %1874 = vmatprep.mubr.f32.mxu0 0.0
        %1875 = vmatmul.mubr.f32.gmra.mxu0 %v1743
        %v1876 = vpop.f32.mrf.mxu0
        %v1877 = vadd.f32 %v1773, %v1876
        %v1878 = vpop.f32.mrf.mxu0
        %1879 = vmatprep.mubr.f32.mxu0 0.0
        %1880 = vmatmul.mubr.f32.gmra.mxu0 %v1744
        %v1881 = vpop.f32.mrf.mxu0
        %v1882 = vadd.f32 %v1773, %v1881
        %v1883 = vpop.f32.mrf.mxu0
        %1884 = vmatprep.mubr.f32.mxu0 0.0
        %1885 = vmatmul.mubr.f32.gmra.mxu0 %v1745
        %v1886 = vpop.f32.mrf.mxu0
        %v1887 = vadd.f32 %v1773, %v1886
        %v1888 = vpop.f32.mrf.mxu0
        %1889 = vmatprep.mubr.f32.mxu0 0.0
        %1890 = vmatmul.mubr.f32.gmra.mxu0 %v1746
        %v1891 = vpop.f32.mrf.mxu0
        %v1892 = vadd.f32 %v1773, %v1891
        %v1893 = vpop.f32.mrf.mxu0
        %1894 = vmatprep.mubr.f32.mxu0 0.0
        %1895 = vmatmul.mubr.f32.gmra.mxu0 %v1747
        %v1896 = vpop.f32.mrf.mxu0
        %v1897 = vadd.f32 %v1773, %v1896
        %v1898 = vpop.f32.mrf.mxu0
        %1899 = vmatprep.mubr.f32.mxu0 0.0
        %1900 = vmatmul.mubr.f32.gmra.mxu0 %v1748
        %v1901 = vpop.f32.mrf.mxu0
        %v1902 = vadd.f32 %v1773, %v1901
        %v1903 = vpop.f32.mrf.mxu0
        %1904 = vmatprep.mubr.f32.mxu0 0.0
        %1905 = vmatmul.mubr.f32.gmra.mxu0 %v1749
        %v1906 = vpop.f32.mrf.mxu0
        %v1907 = vadd.f32 %v1773, %v1906
        %v1908 = vpop.f32.mrf.mxu0
        %1909 = vmatprep.mubr.f32.mxu0 0.0
        %1910 = vmatmul.mubr.f32.gmra.mxu0 %v1750
        %v1911 = vpop.f32.mrf.mxu0
        %v1912 = vadd.f32 %v1773, %v1911
        %v1913 = vpop.f32.mrf.mxu0
        %1914 = vmatprep.mubr.f32.mxu0 0.0
        %1915 = vmatmul.mubr.f32.gmra.mxu0 %v1751
        %v1916 = vpop.f32.mrf.mxu0
        %v1917 = vadd.f32 %v1773, %v1916
        %v1918 = vpop.f32.mrf.mxu0
        %1919 = vdwg.mxu0
        %v1920 = vadd.f32 %v1842, %v757
        %v1921 = vadd.f32 %v1847, %v758
        %v1922 = vadd.f32 %v1852, %v759
        %v1923 = vadd.f32 %v1857, %v760
        %v1924 = vadd.f32 %v1862, %v761
        %v1925 = vadd.f32 %v1867, %v762
        %v1926 = vadd.f32 %v1872, %v763
        %v1927 = vadd.f32 %v1877, %v764
        %v1928 = vadd.f32 %v1882, %v765
        %v1929 = vadd.f32 %v1887, %v766
        %v1930 = vadd.f32 %v1892, %v767
        %v1931 = vadd.f32 %v1897, %v768
        %v1932 = vadd.f32 %v1902, %v769
        %v1933 = vadd.f32 %v1907, %v770
        %v1934 = vadd.f32 %v1912, %v771
        %v1935 = vadd.f32 %v1917, %v772
        %1936 = vst.msk [vmem:[%s374] sm:$0xff] %vm446, %v1920
        %1937 = vst.msk [vmem:[%s374 + $0x8] sm:$0xff] %vm446, %v1921
        %1938 = vst.msk [vmem:[%s374 + $0x10] sm:$0xff] %vm446, %v1922
        %1939 = vst.msk [vmem:[%s374 + $0x18] sm:$0xff] %vm446, %v1923
        %1940 = vst.msk [vmem:[%s374 + $0x20] sm:$0xff] %vm446, %v1924
        %1941 = vst.msk [vmem:[%s374 + $0x28] sm:$0xff] %vm446, %v1925
        %1942 = vst.msk [vmem:[%s374 + $0x30] sm:$0xff] %vm446, %v1926
        %1943 = vst.msk [vmem:[%s374 + $0x38] sm:$0xff] %vm446, %v1927
        %1944 = vst.msk [vmem:[%s374 + $0x40] sm:$0xff] %vm446, %v1928
        %1945 = vst.msk [vmem:[%s374 + $0x48] sm:$0xff] %vm446, %v1929
        %1946 = vst.msk [vmem:[%s374 + $0x50] sm:$0xff] %vm446, %v1930
        %1947 = vst.msk [vmem:[%s374 + $0x58] sm:$0xff] %vm446, %v1931
        %1948 = vst.msk [vmem:[%s374 + $0x60] sm:$0xff] %vm446, %v1932
        %1949 = vst.msk [vmem:[%s374 + $0x68] sm:$0xff] %vm446, %v1933
        %1950 = vst.msk [vmem:[%s374 + $0x70] sm:$0xff] %vm446, %v1934
        %1951 = vst.msk [vmem:[%s374 + $0x78] sm:$0xff] %vm446, %v1935
        %s1952 = sand.u32 %s253, 1
        %s1953 = scalar_lea.sflag [#allocation5], %s1952
        %s1954 = sand.u32 %s253, 1
        %s1955 = smul.addr %s1954, 128
        %s1956 = scalar_lea.vmem [#allocation4], %s1955
        // Predicated region
        $region61: #{token_mixer_forward.1} parent=59 // pred_check
          %p1957 = pneg %p263
        $region62: #{token_mixer_forward.1} parent=59 // pred_check_branch
          %1959 = sbr.rel (%p1957) target = $region64
        $region63: #{token_mixer_forward.1} parent=59 // pred_region
          %s1960 = smul.u32 8, %s25
          %s1962 = ssub.s32 2048, 2048
          %1963 = vsyncadd %s1953, %s1962
          %s1964 = smul.addr %s1960, 2
          %s1965 = smul.addr %s1964, 128
          %s1966 = scalar_lea.hbm %s10, %s1965
          %s1967 = sshll.u32 %s1956, 4
          %s1968 = int_to_ptr.vmem [resolvable:$true] %s1967
          %1973 = dma.vmem_to_hbm [thread:$0]  %s1968, 2048, %s1966, %s1953, 128, 128, 8
        $region64: #{token_mixer_forward.1} parent=59 // pred_fallthru
          _
      $region60: #{token_mixer_forward.1} parent=5 // pred_fallthru
        _
      %p1974 = scmp.le.s32.totalorder 2, %s20
      // Predicated region
      $region65: #{token_mixer_forward.1} parent=5 // pred_check
        %p1975 = pneg %p1974
      $region66: #{token_mixer_forward.1} parent=5 // pred_check_branch
        %1977 = sbr.rel (%p1975) target = $region68
      $region67: #{token_mixer_forward.1} parent=5 // pred_region
        %s1978 = ssub.s32 %s20, 2
        // Predicated region
        $region69: #{token_mixer_forward.1} parent=67 // pred_check
          %p1979 = pneg %p269
        $region70: #{token_mixer_forward.1} parent=67 // pred_check_branch
          %1981 = sbr.rel (%p1979) target = $region72
        $region71: #{token_mixer_forward.1} parent=67 // pred_region
          %s1982 = sand.u32 %s254, 1
          %s1983 = scalar_lea.sflag [#allocation5], %s1982
          %s1984 = sand.u32 %s254, 1
          %s1985 = smul.addr %s1984, 128
          %s1986 = scalar_lea.vmem [#allocation4], %s1985
          %1987 = dma.done %s1983, 2048
        $region72: #{token_mixer_forward.1} parent=67 // pred_fallthru
          _
      $region68: #{token_mixer_forward.1} parent=5 // pred_fallthru
        _
    $region6: #{token_mixer_forward.1} parent=1 // loop_footer
      %s24 = sadd.s32 1, %s20
    $region7: #{token_mixer_forward.1} parent=1 // loop_footer_branch
      %19 = sbr.rel target = $region3
    $region8: #{token_mixer_forward.1} parent=1 // loop_exit
      _
    %1988 = vsyncpa [#allocation5], 1
    %s1989 = scalar_lea.sflag [#allocation5], 1
    %1990 = vsyncpa %s1989, 1

</llo_original>
